<compile_context>
chip_gen: v5e
topology: v5e:2x2
jax: 0.10.0
libtpu: 0.0.40
codegen_flags: <defaults>
</compile_context>

<pallas_src>
import functools

import jax
import jax.numpy as jnp
from jax.experimental import pallas as pl
from jax.experimental.pallas import tpu as pltpu


# ----------------------------- Pallas kernel ------------------------------ #

def _vae_kernel(
    x_ref, eps_ref,
    w1_ref, b1_ref, w2_ref, b2_ref, w3_ref, b3_ref,
    whd_ref, bhd_ref,                       # fused [mu | logvar] head
    dw1_ref, db1_ref, dw2_ref, db2_ref, dw3_ref, db3_ref, dw4_ref, db4_ref,
    xhat_ref, mulv_ref,
):
    def linear(x, w_ref, b_ref):
        w = w_ref[...]
        # Big weights are stored bf16: run a native bf16 MXU matmul with f32
        # accumulation instead of upcasting the (large) weight to f32.
        if w.dtype == jnp.bfloat16:
            x = x.astype(jnp.bfloat16)
        else:
            x = x.astype(jnp.float32)
        acc = jnp.dot(x, w, preferred_element_type=jnp.float32)
        return acc + b_ref[...]

    def leaky_relu(x):
        # nn.LeakyReLU default negative_slope = 0.01
        return jnp.where(x > 0, x, 0.01 * x)

    # ---------------- encoder ----------------
    x = x_ref[...]
    h = leaky_relu(linear(x, w1_ref, b1_ref))     # (TB, 256)   bf16 MXU
    h = leaky_relu(linear(h, w2_ref, b2_ref))     # (TB, 128)   f32
    h = leaky_relu(linear(h, w3_ref, b3_ref))     # (TB, 64)    f32
    # TODO(synk): nn.Dropout() (p=0.5, training mode) omitted; eval-mode identity used.

    # Fused mu|logvar head: one matmul + one output write instead of two.
    mulv = linear(h, whd_ref, bhd_ref)            # (TB, 2*latent)
    mulv_ref[...] = mulv

    latent = eps_ref.shape[-1]
    mu = mulv[:, :latent]
    logvar = mulv[:, latent:]

    # ---------------- reparameterize ----------------
    std = jnp.exp(0.5 * logvar)
    z = mu + eps_ref[...] * std                   # (TB, latent)

    # ---------------- decoder ----------------
    d = leaky_relu(linear(z, dw1_ref, db1_ref))   # (TB, 64)    f32
    d = leaky_relu(linear(d, dw2_ref, db2_ref))   # (TB, 128)   f32
    d = leaky_relu(linear(d, dw3_ref, db3_ref))   # (TB, 256)   f32
    logits = linear(d, dw4_ref, db4_ref)          # (TB, C*H*W) bf16 MXU
    xhat_ref[...] = jax.nn.sigmoid(logits)


# ------------------------------ JAX wrapper -------------------------------- #

@functools.partial(jax.jit, static_argnames=("channel_size", "image_size"))
def vae_forward(x_nchw, eps, params, *, channel_size, image_size):
    """Runs the VAE forward pass.

    Args:
      x_nchw: (B, C, H, W) float32 input image.
      eps:    (B, latent_dim) float32 standard normal noise (reparameterize).
      params: dict of pre-transposed weights / (1, out) biases (big weights bf16).
    Returns:
      (x_hat (B, C, H, W), mu (B, latent), logvar (B, latent))
    """
    B = x_nchw.shape[0]
    in_dim = channel_size * image_size * image_size
    latent_dim = eps.shape[1]

    x_flat = x_nchw.reshape(B, in_dim).astype(jnp.float32)  # nn.Flatten on NCHW

    # Batch tiling: one block for small B, 256-row tiles for realistic B.
    tile_b = B if B <= 256 else 256
    grid = (pl.cdiv(B, tile_b),)

    def batch_spec(feat):
        return pl.BlockSpec((tile_b, feat), lambda i: (i, 0))

    def resident(arr):
        # Full-array block, constant index_map -> stays resident in VMEM
        # across grid steps (weights fetched once).
        r, c = arr.shape
        return pl.BlockSpec((r, c), lambda i: (0, 0))

    weight_keys = ("w1", "b1", "w2", "b2", "w3", "b3", "whd", "bhd",
                   "dw1", "db1", "dw2", "db2", "dw3", "db3", "dw4", "db4")
    weight_operands = tuple(params[k] for k in weight_keys)

    in_specs = (
        [batch_spec(in_dim), batch_spec(latent_dim)]
        + [resident(w) for w in weight_operands]
    )
    out_specs = (batch_spec(in_dim), batch_spec(2 * latent_dim))

    x_hat_flat, mulv = pl.pallas_call(
        _vae_kernel,
        out_shape=(
            jax.ShapeDtypeStruct((B, in_dim), jnp.float32),
            jax.ShapeDtypeStruct((B, 2 * latent_dim), jnp.float32),
        ),
        grid=grid,
        in_specs=in_specs,
        out_specs=out_specs,
        compiler_params=pltpu.CompilerParams(
            dimension_semantics=("parallel",),
            vmem_limit_bytes=32 * 1024 * 1024,   # v7x-safe (64 MiB physical)
        ),
    )(x_flat, eps.astype(jnp.float32), *weight_operands)

    mu = mulv[:, :latent_dim]
    logvar = mulv[:, latent_dim:]
    x_hat = x_hat_flat.reshape(B, channel_size, image_size, image_size)
    return x_hat, mu, logvar


# ------------------------- deterministic parameters ------------------------ #

def init_params(key, *, latent_dim, channel_size, image_size):
    """Deterministic init mimicking nn.Linear's U(-1/sqrt(fan_in), 1/sqrt(fan_in)).

    The two large weight matrices (w1, dw4) are stored in bfloat16 once here
    (outside jit), so each forward call moves half the bytes from HBM and the
    kernel can issue native bf16 MXU matmuls for them.
    """
    in_dim = channel_size * image_size * image_size

    def linear_init(key, fan_in, fan_out, wdtype=jnp.float32):
        kw, kb = jax.random.split(key)
        bound = 1.0 / jnp.sqrt(float(fan_in))
        w = jax.random.uniform(kw, (fan_in, fan_out), jnp.float32, -bound, bound)
        b = jax.random.uniform(kb, (1, fan_out), jnp.float32, -bound, bound)
        return w.astype(wdtype), b

    keys = jax.random.split(key, 9)
    p = {}
    p["w1"], p["b1"] = linear_init(keys[0], in_dim, 256, jnp.bfloat16)   # big
    p["w2"], p["b2"] = linear_init(keys[1], 256, 128)
    p["w3"], p["b3"] = linear_init(keys[2], 128, 64)
    wmu, bmu = linear_init(keys[3], 64, latent_dim)
    wlv, blv = linear_init(keys[4], 64, latent_dim)
    # Fused [mu | logvar] head.
    p["whd"] = jnp.concatenate([wmu, wlv], axis=1)          # (64, 2*latent)
    p["bhd"] = jnp.concatenate([bmu, blv], axis=1)          # (1, 2*latent)
    p["dw1"], p["db1"] = linear_init(keys[5], latent_dim, 64)
    p["dw2"], p["db2"] = linear_init(keys[6], 64, 128)
    p["dw3"], p["db3"] = linear_init(keys[7], 128, 256)
    p["dw4"], p["db4"] = linear_init(keys[8], 256, in_dim, jnp.bfloat16)  # big
    return p


# ----------------------------------- main ---------------------------------- #

if __name__ == "__main__":
    # Small shapes consistent with the module's forward:
    #   batch=2, channel_size=4, image_size=16 -> flattened dim = 1024, latent_dim=8
    B, C, H, L = 2, 4, 16, 8

    key = jax.random.PRNGKey(0)
    k_x, k_eps, k_params = jax.random.split(key, 3)

    x = jax.random.uniform(k_x, (B, C, H, H), jnp.float32)          # NCHW input
    eps = jax.random.normal(k_eps, (B, L), jnp.float32)             # reparam noise
    params = init_params(k_params, latent_dim=L, channel_size=C, image_size=H)

    x_hat, mu, logvar = vae_forward(x, eps, params, channel_size=C, image_size=H)
    jax.block_until_ready((x_hat, mu, logvar))

    assert x_hat.shape == (B, C, H, H)
    assert mu.shape == (B, L) and logvar.shape == (B, L)
    assert bool(jnp.all(jnp.isfinite(x_hat)))
    assert bool(jnp.all(jnp.isfinite(mu))) and bool(jnp.all(jnp.isfinite(logvar)))
    assert bool(jnp.all((x_hat >= 0.0) & (x_hat <= 1.0)))           # sigmoid range

    print("KERNEL_OK")
</pallas_src>

<mosaic_0001>
module attributes {stable_mosaic.version = 11 : i64} {
  func.func @_vae_kernel(%arg0: i32, %arg1: memref<2x1024xf32, #tpu.memory_space<vmem>>, %arg2: memref<2x8xf32, #tpu.memory_space<vmem>>, %arg3: memref<1024x256xbf16, #tpu.memory_space<vmem>>, %arg4: memref<1x256xf32, #tpu.memory_space<vmem>>, %arg5: memref<256x128xf32, #tpu.memory_space<vmem>>, %arg6: memref<1x128xf32, #tpu.memory_space<vmem>>, %arg7: memref<128x64xf32, #tpu.memory_space<vmem>>, %arg8: memref<1x64xf32, #tpu.memory_space<vmem>>, %arg9: memref<64x16xf32, #tpu.memory_space<vmem>>, %arg10: memref<1x16xf32, #tpu.memory_space<vmem>>, %arg11: memref<8x64xf32, #tpu.memory_space<vmem>>, %arg12: memref<1x64xf32, #tpu.memory_space<vmem>>, %arg13: memref<64x128xf32, #tpu.memory_space<vmem>>, %arg14: memref<1x128xf32, #tpu.memory_space<vmem>>, %arg15: memref<128x256xf32, #tpu.memory_space<vmem>>, %arg16: memref<1x256xf32, #tpu.memory_space<vmem>>, %arg17: memref<256x1024xbf16, #tpu.memory_space<vmem>>, %arg18: memref<1x1024xf32, #tpu.memory_space<vmem>>, %arg19: memref<2x1024xf32, #tpu.memory_space<vmem>>, %arg20: memref<2x16xf32, #tpu.memory_space<vmem>>) attributes {dimension_semantics = [#tpu.dimension_semantics<parallel>], iteration_bounds = array<i64: 1>, scalar_prefetch = 0 : i64, scratch_operands = 0 : i64, tpu.core_type = #tpu.core_type<tc>, window_params = [{transform_indices = @transform_0, window_bounds = array<i64: 2, 1024>}, {transform_indices = @transform_1, window_bounds = array<i64: 2, 8>}, {pipeline_mode = #tpu.pipeline_mode<synchronous>, transform_indices = @transform_2, window_bounds = array<i64: 1024, 256>}, {pipeline_mode = #tpu.pipeline_mode<synchronous>, transform_indices = @transform_3, window_bounds = array<i64: 1, 256>}, {pipeline_mode = #tpu.pipeline_mode<synchronous>, transform_indices = @transform_4, window_bounds = array<i64: 256, 128>}, {pipeline_mode = #tpu.pipeline_mode<synchronous>, transform_indices = @transform_5, window_bounds = array<i64: 1, 128>}, {pipeline_mode = #tpu.pipeline_mode<synchronous>, transform_indices = @transform_6, window_bounds = array<i64: 128, 64>}, {pipeline_mode = #tpu.pipeline_mode<synchronous>, transform_indices = @transform_7, window_bounds = array<i64: 1, 64>}, {pipeline_mode = #tpu.pipeline_mode<synchronous>, transform_indices = @transform_8, window_bounds = array<i64: 64, 16>}, {pipeline_mode = #tpu.pipeline_mode<synchronous>, transform_indices = @transform_9, window_bounds = array<i64: 1, 16>}, {pipeline_mode = #tpu.pipeline_mode<synchronous>, transform_indices = @transform_10, window_bounds = array<i64: 8, 64>}, {pipeline_mode = #tpu.pipeline_mode<synchronous>, transform_indices = @transform_11, window_bounds = array<i64: 1, 64>}, {pipeline_mode = #tpu.pipeline_mode<synchronous>, transform_indices = @transform_12, window_bounds = array<i64: 64, 128>}, {pipeline_mode = #tpu.pipeline_mode<synchronous>, transform_indices = @transform_13, window_bounds = array<i64: 1, 128>}, {pipeline_mode = #tpu.pipeline_mode<synchronous>, transform_indices = @transform_14, window_bounds = array<i64: 128, 256>}, {pipeline_mode = #tpu.pipeline_mode<synchronous>, transform_indices = @transform_15, window_bounds = array<i64: 1, 256>}, {pipeline_mode = #tpu.pipeline_mode<synchronous>, transform_indices = @transform_16, window_bounds = array<i64: 256, 1024>}, {pipeline_mode = #tpu.pipeline_mode<synchronous>, transform_indices = @transform_17, window_bounds = array<i64: 1, 1024>}, {transform_indices = @transform_18, window_bounds = array<i64: 2, 1024>}, {transform_indices = @transform_19, window_bounds = array<i64: 2, 16>}]} {
    %c0 = arith.constant 0 : index
    %c0_0 = arith.constant 0 : index
    %0 = vector.load %arg1[%c0, %c0_0] : memref<2x1024xf32, #tpu.memory_space<vmem>>, vector<2x1024xf32>
    %c0_1 = arith.constant 0 : index
    %c0_2 = arith.constant 0 : index
    %1 = vector.load %arg3[%c0_1, %c0_2] : memref<1024x256xbf16, #tpu.memory_space<vmem>>, vector<1024x256xbf16>
    %2 = arith.truncf %0 : vector<2x1024xf32> to vector<2x1024xbf16>
    %cst = arith.constant dense<0.000000e+00> : vector<2x256xf32>
    %3 = tpu.matmul %2, %1, %cst {dimension_numbers = #tpu.dot_dimension_numbers<[1], [0], [0], [1], [0, 0, 1, 1], [], []>} : vector<2x1024xbf16>, vector<1024x256xbf16>, vector<2x256xf32> -> vector<2x256xf32>
    %c0_3 = arith.constant 0 : index
    %c0_4 = arith.constant 0 : index
    %4 = vector.load %arg4[%c0_3, %c0_4] : memref<1x256xf32, #tpu.memory_space<vmem>>, vector<1x256xf32>
    %5 = vector.broadcast %4 : vector<1x256xf32> to vector<2x256xf32>
    %6 = arith.addf %3, %5 : vector<2x256xf32>
    %cst_5 = arith.constant 0.000000e+00 : f32
    %7 = vector.broadcast %cst_5 : f32 to vector<2x256xf32>
    %8 = arith.cmpf ogt, %6, %7 : vector<2x256xf32>
    %cst_6 = arith.constant 0.00999999977 : f32
    %9 = vector.broadcast %cst_6 : f32 to vector<2x256xf32>
    %10 = arith.mulf %9, %6 : vector<2x256xf32>
    %11 = arith.select %8, %6, %10 : vector<2x256xi1>, vector<2x256xf32>
    %c0_7 = arith.constant 0 : index
    %c0_8 = arith.constant 0 : index
    %12 = vector.load %arg5[%c0_7, %c0_8] : memref<256x128xf32, #tpu.memory_space<vmem>>, vector<256x128xf32>
    %cst_9 = arith.constant dense<0.000000e+00> : vector<2x128xf32>
    %13 = tpu.matmul %11, %12, %cst_9 {dimension_numbers = #tpu.dot_dimension_numbers<[1], [0], [0], [1], [0, 0, 1, 1], [], []>} : vector<2x256xf32>, vector<256x128xf32>, vector<2x128xf32> -> vector<2x128xf32>
    %c0_10 = arith.constant 0 : index
    %c0_11 = arith.constant 0 : index
    %14 = vector.load %arg6[%c0_10, %c0_11] : memref<1x128xf32, #tpu.memory_space<vmem>>, vector<1x128xf32>
    %15 = vector.broadcast %14 : vector<1x128xf32> to vector<2x128xf32>
    %16 = arith.addf %13, %15 : vector<2x128xf32>
    %cst_12 = arith.constant 0.000000e+00 : f32
    %17 = vector.broadcast %cst_12 : f32 to vector<2x128xf32>
    %18 = arith.cmpf ogt, %16, %17 : vector<2x128xf32>
    %cst_13 = arith.constant 0.00999999977 : f32
    %19 = vector.broadcast %cst_13 : f32 to vector<2x128xf32>
    %20 = arith.mulf %19, %16 : vector<2x128xf32>
    %21 = arith.select %18, %16, %20 : vector<2x128xi1>, vector<2x128xf32>
    %c0_14 = arith.constant 0 : index
    %c0_15 = arith.constant 0 : index
    %22 = vector.load %arg7[%c0_14, %c0_15] : memref<128x64xf32, #tpu.memory_space<vmem>>, vector<128x64xf32>
    %cst_16 = arith.constant dense<0.000000e+00> : vector<2x64xf32>
    %23 = tpu.matmul %21, %22, %cst_16 {dimension_numbers = #tpu.dot_dimension_numbers<[1], [0], [0], [1], [0, 0, 1, 1], [], []>} : vector<2x128xf32>, vector<128x64xf32>, vector<2x64xf32> -> vector<2x64xf32>
    %c0_17 = arith.constant 0 : index
    %c0_18 = arith.constant 0 : index
    %24 = vector.load %arg8[%c0_17, %c0_18] : memref<1x64xf32, #tpu.memory_space<vmem>>, vector<1x64xf32>
    %25 = vector.broadcast %24 : vector<1x64xf32> to vector<2x64xf32>
    %26 = arith.addf %23, %25 : vector<2x64xf32>
    %cst_19 = arith.constant 0.000000e+00 : f32
    %27 = vector.broadcast %cst_19 : f32 to vector<2x64xf32>
    %28 = arith.cmpf ogt, %26, %27 : vector<2x64xf32>
    %cst_20 = arith.constant 0.00999999977 : f32
    %29 = vector.broadcast %cst_20 : f32 to vector<2x64xf32>
    %30 = arith.mulf %29, %26 : vector<2x64xf32>
    %31 = arith.select %28, %26, %30 : vector<2x64xi1>, vector<2x64xf32>
    %c0_21 = arith.constant 0 : index
    %c0_22 = arith.constant 0 : index
    %32 = vector.load %arg9[%c0_21, %c0_22] : memref<64x16xf32, #tpu.memory_space<vmem>>, vector<64x16xf32>
    %cst_23 = arith.constant dense<0.000000e+00> : vector<2x16xf32>
    %33 = tpu.matmul %31, %32, %cst_23 {dimension_numbers = #tpu.dot_dimension_numbers<[1], [0], [0], [1], [0, 0, 1, 1], [], []>} : vector<2x64xf32>, vector<64x16xf32>, vector<2x16xf32> -> vector<2x16xf32>
    %c0_24 = arith.constant 0 : index
    %c0_25 = arith.constant 0 : index
    %34 = vector.load %arg10[%c0_24, %c0_25] : memref<1x16xf32, #tpu.memory_space<vmem>>, vector<1x16xf32>
    %35 = vector.broadcast %34 : vector<1x16xf32> to vector<2x16xf32>
    %36 = arith.addf %33, %35 : vector<2x16xf32>
    %c0_26 = arith.constant 0 : index
    %c0_27 = arith.constant 0 : index
    %37 = vector.load %arg20[%c0_26, %c0_27] : memref<2x16xf32, #tpu.memory_space<vmem>>, vector<2x16xf32>
    tpu.vector_store %arg20[%c0_26, %c0_27], %36 {strides = array<i32>} : memref<2x16xf32, #tpu.memory_space<vmem>>, vector<2x16xf32>,
    %38 = vector.extract_strided_slice %36 {offsets = [0, 0], sizes = [2, 8], strides = [1, 1]} : vector<2x16xf32> to vector<2x8xf32>
    %39 = vector.extract_strided_slice %36 {offsets = [0, 8], sizes = [2, 8], strides = [1, 1]} : vector<2x16xf32> to vector<2x8xf32>
    %cst_28 = arith.constant 5.000000e-01 : f32
    %40 = vector.broadcast %cst_28 : f32 to vector<2x8xf32>
    %41 = arith.mulf %40, %39 : vector<2x8xf32>
    %42 = math.exp %41 : vector<2x8xf32>
    %c0_29 = arith.constant 0 : index
    %c0_30 = arith.constant 0 : index
    %43 = vector.load %arg2[%c0_29, %c0_30] : memref<2x8xf32, #tpu.memory_space<vmem>>, vector<2x8xf32>
    %44 = arith.mulf %43, %42 : vector<2x8xf32>
    %45 = arith.addf %38, %44 : vector<2x8xf32>
    %c0_31 = arith.constant 0 : index
    %c0_32 = arith.constant 0 : index
    %46 = vector.load %arg11[%c0_31, %c0_32] : memref<8x64xf32, #tpu.memory_space<vmem>>, vector<8x64xf32>
    %cst_33 = arith.constant dense<0.000000e+00> : vector<2x64xf32>
    %47 = tpu.matmul %45, %46, %cst_33 {dimension_numbers = #tpu.dot_dimension_numbers<[1], [0], [0], [1], [0, 0, 1, 1], [], []>} : vector<2x8xf32>, vector<8x64xf32>, vector<2x64xf32> -> vector<2x64xf32>
    %c0_34 = arith.constant 0 : index
    %c0_35 = arith.constant 0 : index
    %48 = vector.load %arg12[%c0_34, %c0_35] : memref<1x64xf32, #tpu.memory_space<vmem>>, vector<1x64xf32>
    %49 = vector.broadcast %48 : vector<1x64xf32> to vector<2x64xf32>
    %50 = arith.addf %47, %49 : vector<2x64xf32>
    %cst_36 = arith.constant 0.000000e+00 : f32
    %51 = vector.broadcast %cst_36 : f32 to vector<2x64xf32>
    %52 = arith.cmpf ogt, %50, %51 : vector<2x64xf32>
    %cst_37 = arith.constant 0.00999999977 : f32
    %53 = vector.broadcast %cst_37 : f32 to vector<2x64xf32>
    %54 = arith.mulf %53, %50 : vector<2x64xf32>
    %55 = arith.select %52, %50, %54 : vector<2x64xi1>, vector<2x64xf32>
    %c0_38 = arith.constant 0 : index
    %c0_39 = arith.constant 0 : index
    %56 = vector.load %arg13[%c0_38, %c0_39] : memref<64x128xf32, #tpu.memory_space<vmem>>, vector<64x128xf32>
    %cst_40 = arith.constant dense<0.000000e+00> : vector<2x128xf32>
    %57 = tpu.matmul %55, %56, %cst_40 {dimension_numbers = #tpu.dot_dimension_numbers<[1], [0], [0], [1], [0, 0, 1, 1], [], []>} : vector<2x64xf32>, vector<64x128xf32>, vector<2x128xf32> -> vector<2x128xf32>
    %c0_41 = arith.constant 0 : index
    %c0_42 = arith.constant 0 : index
    %58 = vector.load %arg14[%c0_41, %c0_42] : memref<1x128xf32, #tpu.memory_space<vmem>>, vector<1x128xf32>
    %59 = vector.broadcast %58 : vector<1x128xf32> to vector<2x128xf32>
    %60 = arith.addf %57, %59 : vector<2x128xf32>
    %cst_43 = arith.constant 0.000000e+00 : f32
    %61 = vector.broadcast %cst_43 : f32 to vector<2x128xf32>
    %62 = arith.cmpf ogt, %60, %61 : vector<2x128xf32>
    %cst_44 = arith.constant 0.00999999977 : f32
    %63 = vector.broadcast %cst_44 : f32 to vector<2x128xf32>
    %64 = arith.mulf %63, %60 : vector<2x128xf32>
    %65 = arith.select %62, %60, %64 : vector<2x128xi1>, vector<2x128xf32>
    %c0_45 = arith.constant 0 : index
    %c0_46 = arith.constant 0 : index
    %66 = vector.load %arg15[%c0_45, %c0_46] : memref<128x256xf32, #tpu.memory_space<vmem>>, vector<128x256xf32>
    %cst_47 = arith.constant dense<0.000000e+00> : vector<2x256xf32>
    %67 = tpu.matmul %65, %66, %cst_47 {dimension_numbers = #tpu.dot_dimension_numbers<[1], [0], [0], [1], [0, 0, 1, 1], [], []>} : vector<2x128xf32>, vector<128x256xf32>, vector<2x256xf32> -> vector<2x256xf32>
    %c0_48 = arith.constant 0 : index
    %c0_49 = arith.constant 0 : index
    %68 = vector.load %arg16[%c0_48, %c0_49] : memref<1x256xf32, #tpu.memory_space<vmem>>, vector<1x256xf32>
    %69 = vector.broadcast %68 : vector<1x256xf32> to vector<2x256xf32>
    %70 = arith.addf %67, %69 : vector<2x256xf32>
    %cst_50 = arith.constant 0.000000e+00 : f32
    %71 = vector.broadcast %cst_50 : f32 to vector<2x256xf32>
    %72 = arith.cmpf ogt, %70, %71 : vector<2x256xf32>
    %cst_51 = arith.constant 0.00999999977 : f32
    %73 = vector.broadcast %cst_51 : f32 to vector<2x256xf32>
    %74 = arith.mulf %73, %70 : vector<2x256xf32>
    %75 = arith.select %72, %70, %74 : vector<2x256xi1>, vector<2x256xf32>
    %c0_52 = arith.constant 0 : index
    %c0_53 = arith.constant 0 : index
    %76 = vector.load %arg17[%c0_52, %c0_53] : memref<256x1024xbf16, #tpu.memory_space<vmem>>, vector<256x1024xbf16>
    %77 = arith.truncf %75 : vector<2x256xf32> to vector<2x256xbf16>
    %cst_54 = arith.constant dense<0.000000e+00> : vector<2x1024xf32>
    %78 = tpu.matmul %77, %76, %cst_54 {dimension_numbers = #tpu.dot_dimension_numbers<[1], [0], [0], [1], [0, 0, 1, 1], [], []>} : vector<2x256xbf16>, vector<256x1024xbf16>, vector<2x1024xf32> -> vector<2x1024xf32>
    %c0_55 = arith.constant 0 : index
    %c0_56 = arith.constant 0 : index
    %79 = vector.load %arg18[%c0_55, %c0_56] : memref<1x1024xf32, #tpu.memory_space<vmem>>, vector<1x1024xf32>
    %80 = vector.broadcast %79 : vector<1x1024xf32> to vector<2x1024xf32>
    %81 = arith.addf %78, %80 : vector<2x1024xf32>
    %82 = arith.negf %81 : vector<2x1024xf32>
    %83 = math.exp %82 : vector<2x1024xf32>
    %cst_57 = arith.constant 1.000000e+00 : f32
    %84 = vector.broadcast %cst_57 : f32 to vector<2x1024xf32>
    %85 = arith.addf %84, %83 : vector<2x1024xf32>
    %86 = arith.divf %84, %85 : vector<2x1024xf32>
    %c0_58 = arith.constant 0 : index
    %c0_59 = arith.constant 0 : index
    %87 = vector.load %arg19[%c0_58, %c0_59] : memref<2x1024xf32, #tpu.memory_space<vmem>>, vector<2x1024xf32>
    tpu.vector_store %arg19[%c0_58, %c0_59], %86 {strides = array<i32>} : memref<2x1024xf32, #tpu.memory_space<vmem>>, vector<2x1024xf32>,
    return
  }
  func.func @transform_0(%arg0: i32) -> (i32, i32) {
    %c0_i32 = arith.constant 0 : i32
    %c0_i32_0 = arith.constant 0 : i32
    return %arg0, %c0_i32 : i32, i32
  }
  func.func @transform_1(%arg0: i32) -> (i32, i32) {
    %c0_i32 = arith.constant 0 : i32
    %c0_i32_0 = arith.constant 0 : i32
    return %arg0, %c0_i32 : i32, i32
  }
  func.func @transform_2(%arg0: i32) -> (i32, i32) {
    %c0_i32 = arith.constant 0 : i32
    %c0_i32_0 = arith.constant 0 : i32
    %c0_i32_1 = arith.constant 0 : i32
    return %c0_i32, %c0_i32_0 : i32, i32
  }
  func.func @transform_3(%arg0: i32) -> (i32, i32) {
    %c0_i32 = arith.constant 0 : i32
    %c0_i32_0 = arith.constant 0 : i32
    %c0_i32_1 = arith.constant 0 : i32
    return %c0_i32, %c0_i32_0 : i32, i32
  }
  func.func @transform_4(%arg0: i32) -> (i32, i32) {
    %c0_i32 = arith.constant 0 : i32
    %c0_i32_0 = arith.constant 0 : i32
    %c0_i32_1 = arith.constant 0 : i32
    return %c0_i32, %c0_i32_0 : i32, i32
  }
  func.func @transform_5(%arg0: i32) -> (i32, i32) {
    %c0_i32 = arith.constant 0 : i32
    %c0_i32_0 = arith.constant 0 : i32
    %c0_i32_1 = arith.constant 0 : i32
    return %c0_i32, %c0_i32_0 : i32, i32
  }
  func.func @transform_6(%arg0: i32) -> (i32, i32) {
    %c0_i32 = arith.constant 0 : i32
    %c0_i32_0 = arith.constant 0 : i32
    %c0_i32_1 = arith.constant 0 : i32
    return %c0_i32, %c0_i32_0 : i32, i32
  }
  func.func @transform_7(%arg0: i32) -> (i32, i32) {
    %c0_i32 = arith.constant 0 : i32
    %c0_i32_0 = arith.constant 0 : i32
    %c0_i32_1 = arith.constant 0 : i32
    return %c0_i32, %c0_i32_0 : i32, i32
  }
  func.func @transform_8(%arg0: i32) -> (i32, i32) {
    %c0_i32 = arith.constant 0 : i32
    %c0_i32_0 = arith.constant 0 : i32
    %c0_i32_1 = arith.constant 0 : i32
    return %c0_i32, %c0_i32_0 : i32, i32
  }
  func.func @transform_9(%arg0: i32) -> (i32, i32) {
    %c0_i32 = arith.constant 0 : i32
    %c0_i32_0 = arith.constant 0 : i32
    %c0_i32_1 = arith.constant 0 : i32
    return %c0_i32, %c0_i32_0 : i32, i32
  }
  func.func @transform_10(%arg0: i32) -> (i32, i32) {
    %c0_i32 = arith.constant 0 : i32
    %c0_i32_0 = arith.constant 0 : i32
    %c0_i32_1 = arith.constant 0 : i32
    return %c0_i32, %c0_i32_0 : i32, i32
  }
  func.func @transform_11(%arg0: i32) -> (i32, i32) {
    %c0_i32 = arith.constant 0 : i32
    %c0_i32_0 = arith.constant 0 : i32
    %c0_i32_1 = arith.constant 0 : i32
    return %c0_i32, %c0_i32_0 : i32, i32
  }
  func.func @transform_12(%arg0: i32) -> (i32, i32) {
    %c0_i32 = arith.constant 0 : i32
    %c0_i32_0 = arith.constant 0 : i32
    %c0_i32_1 = arith.constant 0 : i32
    return %c0_i32, %c0_i32_0 : i32, i32
  }
  func.func @transform_13(%arg0: i32) -> (i32, i32) {
    %c0_i32 = arith.constant 0 : i32
    %c0_i32_0 = arith.constant 0 : i32
    %c0_i32_1 = arith.constant 0 : i32
    return %c0_i32, %c0_i32_0 : i32, i32
  }
  func.func @transform_14(%arg0: i32) -> (i32, i32) {
    %c0_i32 = arith.constant 0 : i32
    %c0_i32_0 = arith.constant 0 : i32
    %c0_i32_1 = arith.constant 0 : i32
    return %c0_i32, %c0_i32_0 : i32, i32
  }
  func.func @transform_15(%arg0: i32) -> (i32, i32) {
    %c0_i32 = arith.constant 0 : i32
    %c0_i32_0 = arith.constant 0 : i32
    %c0_i32_1 = arith.constant 0 : i32
    return %c0_i32, %c0_i32_0 : i32, i32
  }
  func.func @transform_16(%arg0: i32) -> (i32, i32) {
    %c0_i32 = arith.constant 0 : i32
    %c0_i32_0 = arith.constant 0 : i32
    %c0_i32_1 = arith.constant 0 : i32
    return %c0_i32, %c0_i32_0 : i32, i32
  }
  func.func @transform_17(%arg0: i32) -> (i32, i32) {
    %c0_i32 = arith.constant 0 : i32
    %c0_i32_0 = arith.constant 0 : i32
    %c0_i32_1 = arith.constant 0 : i32
    return %c0_i32, %c0_i32_0 : i32, i32
  }
  func.func @transform_18(%arg0: i32) -> (i32, i32) {
    %c0_i32 = arith.constant 0 : i32
    %c0_i32_0 = arith.constant 0 : i32
    return %arg0, %c0_i32 : i32, i32
  }
  func.func @transform_19(%arg0: i32) -> (i32, i32) {
    %c0_i32 = arith.constant 0 : i32
    %c0_i32_0 = arith.constant 0 : i32
    return %arg0, %c0_i32 : i32, i32
  }
}

</mosaic_0001>

<llo_original>
// kernel: vae_forward.1
$region0: #{vae_forward.1}
  #allocation0 [shape = 'u32[]', space=smem, size = 0x4, offset = 0x4, fixed_abs, tag = 'smem constant byte address 0x4 - core index']
  #allocation1 [shape = 'u32[72,128]{1,0:T(1,128)}', space=vmem, size = 0x9000, scoped, tag = 'internal scratch']
  %s0 = inlined_call_operand.vmem [shape: f32[2,1024], index: 0, kind: input, shape index: {}]
  %s1 = inlined_call_operand.vmem [shape: f32[2,8], index: 1, kind: input, shape index: {}]
  %s2 = inlined_call_operand.hbm [shape: bf16[1024,256], index: 2, kind: input, shape index: {}]
  %s3 = inlined_call_operand.vmem [shape: f32[1,256], index: 3, kind: input, shape index: {}]
  %s4 = inlined_call_operand.hbm [shape: f32[256,128], index: 4, kind: input, shape index: {}]
  %s5 = inlined_call_operand.vmem [shape: f32[1,128], index: 5, kind: input, shape index: {}]
  %s6 = inlined_call_operand.vmem [shape: f32[128,64], index: 6, kind: input, shape index: {}]
  %s7 = inlined_call_operand.vmem [shape: f32[1,64], index: 7, kind: input, shape index: {}]
  %s8 = inlined_call_operand.vmem [shape: f32[64,16], index: 8, kind: input, shape index: {}]
  %s9 = inlined_call_operand.vmem [shape: f32[1,16], index: 9, kind: input, shape index: {}]
  %s10 = inlined_call_operand.vmem [shape: f32[8,64], index: 10, kind: input, shape index: {}]
  %s11 = inlined_call_operand.vmem [shape: f32[1,64], index: 11, kind: input, shape index: {}]
  %s12 = inlined_call_operand.vmem [shape: f32[64,128], index: 12, kind: input, shape index: {}]
  %s13 = inlined_call_operand.vmem [shape: f32[1,128], index: 13, kind: input, shape index: {}]
  %s14 = inlined_call_operand.hbm [shape: f32[128,256], index: 14, kind: input, shape index: {}]
  %s15 = inlined_call_operand.vmem [shape: f32[1,256], index: 15, kind: input, shape index: {}]
  %s16 = inlined_call_operand.hbm [shape: bf16[256,1024], index: 16, kind: input, shape index: {}]
  %s17 = inlined_call_operand.vmem [shape: f32[1,1024], index: 17, kind: input, shape index: {}]
  %s18 = inlined_call_operand.vmem [shape: f32[2,1024], index: 18, kind: output, shape index: {0}]
  %s19 = inlined_call_operand.vmem [shape: f32[2,16], index: 19, kind: output, shape index: {1}]
  %20 = xla_tuple %s18, %s19
  %s21 = sld [smem:[#allocation0]]
  $region106: #{vae_forward.1} parent=0
    _
  %s23 = ssub.s32 1, %s21
  %s24 = scalar_select 0, %s23, %s21
  $region1: #{vae_forward.1} parent=0
    #allocation2 [shape = 'u8[524288]{0}', space=vmem, size = 0x80000, scoped, tag = 'input window, operand 2, single buffered']
    #allocation3 [shape = 's32[1]{0}', space=sflag, size = 0x4, scoped, tag = 'scoped memory for vae_forward.1']
    #allocation4 [shape = 'u8[131072]{0}', space=vmem, size = 0x20000, scoped, tag = 'input window, operand 4, single buffered']
    #allocation5 [shape = 's32[1]{0}', space=sflag, size = 0x4, scoped, tag = 'scoped memory for vae_forward.1']
    #allocation6 [shape = 'u8[131072]{0}', space=vmem, size = 0x20000, scoped, tag = 'input window, operand 14, single buffered']
    #allocation7 [shape = 'u8[524288]{0}', space=vmem, size = 0x80000, scoped, tag = 'input window, operand 16, single buffered']
    #allocation8 [shape = 's32[1]{0}', space=sflag, size = 0x4, scoped, tag = 'scoped memory for vae_forward.1']
    %25 = vsyncpa [#allocation3], 0
    %26 = vsyncpa [#allocation5], 0
    %27 = vsyncpa [#allocation8], 0
    // Predicated region
    $region2: #{vae_forward.1} parent=1 // pred_check
      _
    $region3: #{vae_forward.1} parent=1 // pred_check_branch
      %29 = sbr.rel (0) target = $region5
    $region4: #{vae_forward.1} parent=1 // pred_region
      _
    $region5: #{vae_forward.1} parent=1 // pred_fallthru
      _
    // Predicated region
    $region6: #{vae_forward.1} parent=1 // pred_check
      _
    $region7: #{vae_forward.1} parent=1 // pred_check_branch
      %31 = sbr.rel (0) target = $region9
    $region8: #{vae_forward.1} parent=1 // pred_region
      _
    $region9: #{vae_forward.1} parent=1 // pred_fallthru
      _
    // Predicated region
    $region10: #{vae_forward.1} parent=1 // pred_check
      _
    $region11: #{vae_forward.1} parent=1 // pred_check_branch
      %33 = sbr.rel (0) target = $region13
    $region12: #{vae_forward.1} parent=1 // pred_region
      %35 = vsyncadd [#allocation3], 0
      %s36 = sshll.u32 %s2, 4
      %s37 = int_to_ptr.hbm [resolvable:$true] %s36
      %s38 = sshll.u32 [#allocation2], 4
      %s39 = int_to_ptr.vmem [resolvable:$true] %s38
      %44 = dma.hbm_to_vmem [thread:$0]  %s37, 16384, %s39, [#allocation3], 128, 128, 8
    $region13: #{vae_forward.1} parent=1 // pred_fallthru
      _
    // Predicated region
    $region14: #{vae_forward.1} parent=1 // pred_check
      _
    $region15: #{vae_forward.1} parent=1 // pred_check_branch
      %46 = sbr.rel (0) target = $region17
    $region16: #{vae_forward.1} parent=1 // pred_region
      _
    $region17: #{vae_forward.1} parent=1 // pred_fallthru
      _
    // Predicated region
    $region18: #{vae_forward.1} parent=1 // pred_check
      _
    $region19: #{vae_forward.1} parent=1 // pred_check_branch
      %48 = sbr.rel (0) target = $region21
    $region20: #{vae_forward.1} parent=1 // pred_region
      %50 = vsyncadd [#allocation5], 0
      %s51 = sshll.u32 %s4, 4
      %s52 = int_to_ptr.hbm [resolvable:$true] %s51
      %s53 = sshll.u32 [#allocation4], 4
      %s54 = int_to_ptr.vmem [resolvable:$true] %s53
      %59 = dma.hbm_to_vmem [thread:$0]  %s52, 4096, %s54, [#allocation5], 128, 128, 8
    $region21: #{vae_forward.1} parent=1 // pred_fallthru
      _
    // Predicated region
    $region22: #{vae_forward.1} parent=1 // pred_check
      _
    $region23: #{vae_forward.1} parent=1 // pred_check_branch
      %61 = sbr.rel (0) target = $region25
    $region24: #{vae_forward.1} parent=1 // pred_region
      _
    $region25: #{vae_forward.1} parent=1 // pred_fallthru
      _
    // Predicated region
    $region26: #{vae_forward.1} parent=1 // pred_check
      _
    $region27: #{vae_forward.1} parent=1 // pred_check_branch
      %63 = sbr.rel (0) target = $region29
    $region28: #{vae_forward.1} parent=1 // pred_region
      _
    $region29: #{vae_forward.1} parent=1 // pred_fallthru
      _
    // Predicated region
    $region30: #{vae_forward.1} parent=1 // pred_check
      _
    $region31: #{vae_forward.1} parent=1 // pred_check_branch
      %65 = sbr.rel (0) target = $region33
    $region32: #{vae_forward.1} parent=1 // pred_region
      _
    $region33: #{vae_forward.1} parent=1 // pred_fallthru
      _
    // Predicated region
    $region34: #{vae_forward.1} parent=1 // pred_check
      _
    $region35: #{vae_forward.1} parent=1 // pred_check_branch
      %67 = sbr.rel (0) target = $region37
    $region36: #{vae_forward.1} parent=1 // pred_region
      _
    $region37: #{vae_forward.1} parent=1 // pred_fallthru
      _
    // Predicated region
    $region38: #{vae_forward.1} parent=1 // pred_check
      _
    $region39: #{vae_forward.1} parent=1 // pred_check_branch
      %69 = sbr.rel (0) target = $region41
    $region40: #{vae_forward.1} parent=1 // pred_region
      _
    $region41: #{vae_forward.1} parent=1 // pred_fallthru
      _
    // Predicated region
    $region42: #{vae_forward.1} parent=1 // pred_check
      _
    $region43: #{vae_forward.1} parent=1 // pred_check_branch
      %71 = sbr.rel (0) target = $region45
    $region44: #{vae_forward.1} parent=1 // pred_region
      _
    $region45: #{vae_forward.1} parent=1 // pred_fallthru
      _
    // Predicated region
    $region46: #{vae_forward.1} parent=1 // pred_check
      _
    $region47: #{vae_forward.1} parent=1 // pred_check_branch
      %73 = sbr.rel (0) target = $region49
    $region48: #{vae_forward.1} parent=1 // pred_region
      _
    $region49: #{vae_forward.1} parent=1 // pred_fallthru
      _
    // Predicated region
    $region50: #{vae_forward.1} parent=1 // pred_check
      _
    $region51: #{vae_forward.1} parent=1 // pred_check_branch
      %75 = sbr.rel (0) target = $region53
    $region52: #{vae_forward.1} parent=1 // pred_region
      _
    $region53: #{vae_forward.1} parent=1 // pred_fallthru
      _
    // Predicated region
    $region54: #{vae_forward.1} parent=1 // pred_check
      _
    $region55: #{vae_forward.1} parent=1 // pred_check_branch
      %77 = sbr.rel (0) target = $region57
    $region56: #{vae_forward.1} parent=1 // pred_region
      _
    $region57: #{vae_forward.1} parent=1 // pred_fallthru
      _
    // Predicated region
    $region58: #{vae_forward.1} parent=1 // pred_check
      _
    $region59: #{vae_forward.1} parent=1 // pred_check_branch
      %79 = sbr.rel (0) target = $region61
    $region60: #{vae_forward.1} parent=1 // pred_region
      %81 = vsyncadd [#allocation5], 0
      %s82 = sshll.u32 %s14, 4
      %s83 = int_to_ptr.hbm [resolvable:$true] %s82
      %s84 = sshll.u32 [#allocation6], 4
      %s85 = int_to_ptr.vmem [resolvable:$true] %s84
      %90 = dma.hbm_to_vmem [thread:$0]  %s83, 4096, %s85, [#allocation5], 256, 256, 16
    $region61: #{vae_forward.1} parent=1 // pred_fallthru
      _
    // Predicated region
    $region62: #{vae_forward.1} parent=1 // pred_check
      _
    $region63: #{vae_forward.1} parent=1 // pred_check_branch
      %92 = sbr.rel (0) target = $region65
    $region64: #{vae_forward.1} parent=1 // pred_region
      _
    $region65: #{vae_forward.1} parent=1 // pred_fallthru
      _
    // Predicated region
    $region66: #{vae_forward.1} parent=1 // pred_check
      _
    $region67: #{vae_forward.1} parent=1 // pred_check_branch
      %94 = sbr.rel (0) target = $region69
    $region68: #{vae_forward.1} parent=1 // pred_region
      %96 = vsyncadd [#allocation8], 0
      %s97 = sshll.u32 %s16, 4
      %s98 = int_to_ptr.hbm [resolvable:$true] %s97
      %s99 = sshll.u32 [#allocation7], 4
      %s100 = int_to_ptr.vmem [resolvable:$true] %s99
      %105 = dma.hbm_to_vmem [thread:$0]  %s98, 16384, %s100, [#allocation8], 512, 512, 32
    $region69: #{vae_forward.1} parent=1 // pred_fallthru
      _
    // Predicated region
    $region70: #{vae_forward.1} parent=1 // pred_check
      _
    $region71: #{vae_forward.1} parent=1 // pred_check_branch
      %107 = sbr.rel (0) target = $region73
    $region72: #{vae_forward.1} parent=1 // pred_region
      _
    $region73: #{vae_forward.1} parent=1 // pred_fallthru
      _
    // Predicated region
    $region74: #{vae_forward.1} parent=1 // pred_check
      _
    $region75: #{vae_forward.1} parent=1 // pred_check_branch
      %109 = sbr.rel (0) target = $region77
    $region76: #{vae_forward.1} parent=1 // pred_region
      %111 = dma.done [#allocation3], 16384
    $region77: #{vae_forward.1} parent=1 // pred_fallthru
      _
    // Predicated region
    $region78: #{vae_forward.1} parent=1 // pred_check
      _
    $region79: #{vae_forward.1} parent=1 // pred_check_branch
      %113 = sbr.rel (0) target = $region81
    $region80: #{vae_forward.1} parent=1 // pred_region
      %115 = dma.done [#allocation5], 4096
    $region81: #{vae_forward.1} parent=1 // pred_fallthru
      _
    // Predicated region
    $region82: #{vae_forward.1} parent=1 // pred_check
      _
    $region83: #{vae_forward.1} parent=1 // pred_check_branch
      %117 = sbr.rel (0) target = $region85
    $region84: #{vae_forward.1} parent=1 // pred_region
      %119 = dma.done [#allocation5], 4096
    $region85: #{vae_forward.1} parent=1 // pred_fallthru
      _
    // Predicated region
    $region86: #{vae_forward.1} parent=1 // pred_check
      _
    $region87: #{vae_forward.1} parent=1 // pred_check_branch
      %121 = sbr.rel (0) target = $region89
    $region88: #{vae_forward.1} parent=1 // pred_region
      %123 = dma.done [#allocation8], 16384
    $region89: #{vae_forward.1} parent=1 // pred_fallthru
      _
    %v124 = vld [vmem:[%s0] sm:$0xff]
    %v125 = vld [vmem:[%s0 + $0x8] sm:$0xff]
    %v126 = vld [vmem:[#allocation2] sm:$0xff]
    %v127 = vld [vmem:[#allocation2 + $0x8] sm:$0xff]
    %v128 = vld [vmem:[#allocation2 + $0x10] sm:$0xff]
    %v129 = vld [vmem:[#allocation2 + $0x18] sm:$0xff]
    %v130 = vld [vmem:[#allocation2 + $0x20] sm:$0xff]
    %v131 = vld [vmem:[#allocation2 + $0x28] sm:$0xff]
    %v132 = vld [vmem:[#allocation2 + $0x30] sm:$0xff]
    %v133 = vld [vmem:[#allocation2 + $0x38] sm:$0xff]
    %v134 = vld [vmem:[#allocation2 + $0x40] sm:$0xff]
    %v135 = vld [vmem:[#allocation2 + $0x48] sm:$0xff]
    %v136 = vld [vmem:[#allocation2 + $0x50] sm:$0xff]
    %v137 = vld [vmem:[#allocation2 + $0x58] sm:$0xff]
    %v138 = vld [vmem:[#allocation2 + $0x60] sm:$0xff]
    %v139 = vld [vmem:[#allocation2 + $0x68] sm:$0xff]
    %v140 = vld [vmem:[#allocation2 + $0x70] sm:$0xff]
    %v141 = vld [vmem:[#allocation2 + $0x78] sm:$0xff]
    %v142 = vld [vmem:[#allocation2 + $0x80] sm:$0xff]
    %v143 = vld [vmem:[#allocation2 + $0x88] sm:$0xff]
    %v144 = vld [vmem:[#allocation2 + $0x90] sm:$0xff]
    %v145 = vld [vmem:[#allocation2 + $0x98] sm:$0xff]
    %v146 = vld [vmem:[#allocation2 + $0xa0] sm:$0xff]
    %v147 = vld [vmem:[#allocation2 + $0xa8] sm:$0xff]
    %v148 = vld [vmem:[#allocation2 + $0xb0] sm:$0xff]
    %v149 = vld [vmem:[#allocation2 + $0xb8] sm:$0xff]
    %v150 = vld [vmem:[#allocation2 + $0xc0] sm:$0xff]
    %v151 = vld [vmem:[#allocation2 + $0xc8] sm:$0xff]
    %v152 = vld [vmem:[#allocation2 + $0xd0] sm:$0xff]
    %v153 = vld [vmem:[#allocation2 + $0xd8] sm:$0xff]
    %v154 = vld [vmem:[#allocation2 + $0xe0] sm:$0xff]
    %v155 = vld [vmem:[#allocation2 + $0xe8] sm:$0xff]
    %v156 = vld [vmem:[#allocation2 + $0xf0] sm:$0xff]
    %v157 = vld [vmem:[#allocation2 + $0xf8] sm:$0xff]
    %v158 = vld [vmem:[#allocation2 + $0x100] sm:$0xff]
    %v159 = vld [vmem:[#allocation2 + $0x108] sm:$0xff]
    %v160 = vld [vmem:[#allocation2 + $0x110] sm:$0xff]
    %v161 = vld [vmem:[#allocation2 + $0x118] sm:$0xff]
    %v162 = vld [vmem:[#allocation2 + $0x120] sm:$0xff]
    %v163 = vld [vmem:[#allocation2 + $0x128] sm:$0xff]
    %v164 = vld [vmem:[#allocation2 + $0x130] sm:$0xff]
    %v165 = vld [vmem:[#allocation2 + $0x138] sm:$0xff]
    %v166 = vld [vmem:[#allocation2 + $0x140] sm:$0xff]
    %v167 = vld [vmem:[#allocation2 + $0x148] sm:$0xff]
    %v168 = vld [vmem:[#allocation2 + $0x150] sm:$0xff]
    %v169 = vld [vmem:[#allocation2 + $0x158] sm:$0xff]
    %v170 = vld [vmem:[#allocation2 + $0x160] sm:$0xff]
    %v171 = vld [vmem:[#allocation2 + $0x168] sm:$0xff]
    %v172 = vld [vmem:[#allocation2 + $0x170] sm:$0xff]
    %v173 = vld [vmem:[#allocation2 + $0x178] sm:$0xff]
    %v174 = vld [vmem:[#allocation2 + $0x180] sm:$0xff]
    %v175 = vld [vmem:[#allocation2 + $0x188] sm:$0xff]
    %v176 = vld [vmem:[#allocation2 + $0x190] sm:$0xff]
    %v177 = vld [vmem:[#allocation2 + $0x198] sm:$0xff]
    %v178 = vld [vmem:[#allocation2 + $0x1a0] sm:$0xff]
    %v179 = vld [vmem:[#allocation2 + $0x1a8] sm:$0xff]
    %v180 = vld [vmem:[#allocation2 + $0x1b0] sm:$0xff]
    %v181 = vld [vmem:[#allocation2 + $0x1b8] sm:$0xff]
    %v182 = vld [vmem:[#allocation2 + $0x1c0] sm:$0xff]
    %v183 = vld [vmem:[#allocation2 + $0x1c8] sm:$0xff]
    %v184 = vld [vmem:[#allocation2 + $0x1d0] sm:$0xff]
    %v185 = vld [vmem:[#allocation2 + $0x1d8] sm:$0xff]
    %v186 = vld [vmem:[#allocation2 + $0x1e0] sm:$0xff]
    %v187 = vld [vmem:[#allocation2 + $0x1e8] sm:$0xff]
    %v188 = vld [vmem:[#allocation2 + $0x1f0] sm:$0xff]
    %v189 = vld [vmem:[#allocation2 + $0x1f8] sm:$0xff]
    %v190 = vld [vmem:[#allocation2 + $0x200] sm:$0xff]
    %v191 = vld [vmem:[#allocation2 + $0x208] sm:$0xff]
    %v192 = vld [vmem:[#allocation2 + $0x210] sm:$0xff]
    %v193 = vld [vmem:[#allocation2 + $0x218] sm:$0xff]
    %v194 = vld [vmem:[#allocation2 + $0x220] sm:$0xff]
    %v195 = vld [vmem:[#allocation2 + $0x228] sm:$0xff]
    %v196 = vld [vmem:[#allocation2 + $0x230] sm:$0xff]
    %v197 = vld [vmem:[#allocation2 + $0x238] sm:$0xff]
    %v198 = vld [vmem:[#allocation2 + $0x240] sm:$0xff]
    %v199 = vld [vmem:[#allocation2 + $0x248] sm:$0xff]
    %v200 = vld [vmem:[#allocation2 + $0x250] sm:$0xff]
    %v201 = vld [vmem:[#allocation2 + $0x258] sm:$0xff]
    %v202 = vld [vmem:[#allocation2 + $0x260] sm:$0xff]
    %v203 = vld [vmem:[#allocation2 + $0x268] sm:$0xff]
    %v204 = vld [vmem:[#allocation2 + $0x270] sm:$0xff]
    %v205 = vld [vmem:[#allocation2 + $0x278] sm:$0xff]
    %v206 = vld [vmem:[#allocation2 + $0x280] sm:$0xff]
    %v207 = vld [vmem:[#allocation2 + $0x288] sm:$0xff]
    %v208 = vld [vmem:[#allocation2 + $0x290] sm:$0xff]
    %v209 = vld [vmem:[#allocation2 + $0x298] sm:$0xff]
    %v210 = vld [vmem:[#allocation2 + $0x2a0] sm:$0xff]
    %v211 = vld [vmem:[#allocation2 + $0x2a8] sm:$0xff]
    %v212 = vld [vmem:[#allocation2 + $0x2b0] sm:$0xff]
    %v213 = vld [vmem:[#allocation2 + $0x2b8] sm:$0xff]
    %v214 = vld [vmem:[#allocation2 + $0x2c0] sm:$0xff]
    %v215 = vld [vmem:[#allocation2 + $0x2c8] sm:$0xff]
    %v216 = vld [vmem:[#allocation2 + $0x2d0] sm:$0xff]
    %v217 = vld [vmem:[#allocation2 + $0x2d8] sm:$0xff]
    %v218 = vld [vmem:[#allocation2 + $0x2e0] sm:$0xff]
    %v219 = vld [vmem:[#allocation2 + $0x2e8] sm:$0xff]
    %v220 = vld [vmem:[#allocation2 + $0x2f0] sm:$0xff]
    %v221 = vld [vmem:[#allocation2 + $0x2f8] sm:$0xff]
    %v222 = vld [vmem:[#allocation2 + $0x300] sm:$0xff]
    %v223 = vld [vmem:[#allocation2 + $0x308] sm:$0xff]
    %v224 = vld [vmem:[#allocation2 + $0x310] sm:$0xff]
    %v225 = vld [vmem:[#allocation2 + $0x318] sm:$0xff]
    %v226 = vld [vmem:[#allocation2 + $0x320] sm:$0xff]
    %v227 = vld [vmem:[#allocation2 + $0x328] sm:$0xff]
    %v228 = vld [vmem:[#allocation2 + $0x330] sm:$0xff]
    %v229 = vld [vmem:[#allocation2 + $0x338] sm:$0xff]
    %v230 = vld [vmem:[#allocation2 + $0x340] sm:$0xff]
    %v231 = vld [vmem:[#allocation2 + $0x348] sm:$0xff]
    %v232 = vld [vmem:[#allocation2 + $0x350] sm:$0xff]
    %v233 = vld [vmem:[#allocation2 + $0x358] sm:$0xff]
    %v234 = vld [vmem:[#allocation2 + $0x360] sm:$0xff]
    %v235 = vld [vmem:[#allocation2 + $0x368] sm:$0xff]
    %v236 = vld [vmem:[#allocation2 + $0x370] sm:$0xff]
    %v237 = vld [vmem:[#allocation2 + $0x378] sm:$0xff]
    %v238 = vld [vmem:[#allocation2 + $0x380] sm:$0xff]
    %v239 = vld [vmem:[#allocation2 + $0x388] sm:$0xff]
    %v240 = vld [vmem:[#allocation2 + $0x390] sm:$0xff]
    %v241 = vld [vmem:[#allocation2 + $0x398] sm:$0xff]
    %v242 = vld [vmem:[#allocation2 + $0x3a0] sm:$0xff]
    %v243 = vld [vmem:[#allocation2 + $0x3a8] sm:$0xff]
    %v244 = vld [vmem:[#allocation2 + $0x3b0] sm:$0xff]
    %v245 = vld [vmem:[#allocation2 + $0x3b8] sm:$0xff]
    %v246 = vld [vmem:[#allocation2 + $0x3c0] sm:$0xff]
    %v247 = vld [vmem:[#allocation2 + $0x3c8] sm:$0xff]
    %v248 = vld [vmem:[#allocation2 + $0x3d0] sm:$0xff]
    %v249 = vld [vmem:[#allocation2 + $0x3d8] sm:$0xff]
    %v250 = vld [vmem:[#allocation2 + $0x3e0] sm:$0xff]
    %v251 = vld [vmem:[#allocation2 + $0x3e8] sm:$0xff]
    %v252 = vld [vmem:[#allocation2 + $0x3f0] sm:$0xff]
    %v253 = vld [vmem:[#allocation2 + $0x3f8] sm:$0xff]
    %256 = vst [vmem:[#allocation1] ss:$4 sm:$0xff] %v124
    %s257 = scalar_lea.vmem [#allocation1], 32
    %258 = vst [vmem:[%s257] ss:$4 sm:$0xff] %v125
    %v259 = vld.sshfl [vmem:[#allocation1] sm:$0xff pattern:$0x73625140]
    %v260 = vld.sshfl [vmem:[#allocation1 + $0x8] sm:$0xff pattern:$0x73625140]
    %v261 = vld.sshfl [vmem:[#allocation1 + $0x10] sm:$0xff pattern:$0x73625140]
    %v262 = vld.sshfl [vmem:[#allocation1 + $0x18] sm:$0xff pattern:$0x73625140]
    %v263 = vld.sshfl [vmem:[#allocation1 + $0x20] sm:$0xff pattern:$0x73625140]
    %v264 = vld.sshfl [vmem:[#allocation1 + $0x28] sm:$0xff pattern:$0x73625140]
    %v265 = vld.sshfl [vmem:[#allocation1 + $0x30] sm:$0xff pattern:$0x73625140]
    %v266 = vld.sshfl [vmem:[#allocation1 + $0x38] sm:$0xff pattern:$0x73625140]
    %v275 = vpack.c.bf16 %v259, %v259
    %v276 = vpack.c.bf16 %v260, %v260
    %v277 = vpack.c.bf16 %v261, %v261
    %v278 = vpack.c.bf16 %v262, %v262
    %v279 = vpack.c.bf16 %v263, %v263
    %v280 = vpack.c.bf16 %v264, %v264
    %v281 = vpack.c.bf16 %v265, %v265
    %v282 = vpack.c.bf16 %v266, %v266
    %v283 = vld [vmem:[%s3] sm:$0x3]
    %v285 = vperm.slane %v283, 0
    %v286 = vperm.slane %v283, 1
    %v417 = vunpack.c.l.b16 %v126
    %v418 = vunpack.c.h.b16 %v126
    %v419 = vunpack.c.l.b16 %v127
    %v420 = vunpack.c.h.b16 %v127
    %v421 = vunpack.c.l.b16 %v128
    %v422 = vunpack.c.h.b16 %v128
    %v423 = vunpack.c.l.b16 %v129
    %v424 = vunpack.c.h.b16 %v129
    %v425 = vunpack.c.l.b16 %v130
    %v426 = vunpack.c.h.b16 %v130
    %v427 = vunpack.c.l.b16 %v131
    %v428 = vunpack.c.h.b16 %v131
    %v429 = vunpack.c.l.b16 %v132
    %v430 = vunpack.c.h.b16 %v132
    %v431 = vunpack.c.l.b16 %v133
    %v432 = vunpack.c.h.b16 %v133
    %v433 = vunpack.c.l.b16 %v134
    %v434 = vunpack.c.h.b16 %v134
    %v435 = vunpack.c.l.b16 %v135
    %v436 = vunpack.c.h.b16 %v135
    %v437 = vunpack.c.l.b16 %v136
    %v438 = vunpack.c.h.b16 %v136
    %v439 = vunpack.c.l.b16 %v137
    %v440 = vunpack.c.h.b16 %v137
    %v441 = vunpack.c.l.b16 %v138
    %v442 = vunpack.c.h.b16 %v138
    %v443 = vunpack.c.l.b16 %v139
    %v444 = vunpack.c.h.b16 %v139
    %v445 = vunpack.c.l.b16 %v140
    %v446 = vunpack.c.h.b16 %v140
    %v447 = vunpack.c.l.b16 %v141
    %v448 = vunpack.c.h.b16 %v141
    %v449 = vunpack.c.l.b16 %v142
    %v450 = vunpack.c.h.b16 %v142
    %v451 = vunpack.c.l.b16 %v143
    %v452 = vunpack.c.h.b16 %v143
    %v453 = vunpack.c.l.b16 %v144
    %v454 = vunpack.c.h.b16 %v144
    %v455 = vunpack.c.l.b16 %v145
    %v456 = vunpack.c.h.b16 %v145
    %v457 = vunpack.c.l.b16 %v146
    %v458 = vunpack.c.h.b16 %v146
    %v459 = vunpack.c.l.b16 %v147
    %v460 = vunpack.c.h.b16 %v147
    %v461 = vunpack.c.l.b16 %v148
    %v462 = vunpack.c.h.b16 %v148
    %v463 = vunpack.c.l.b16 %v149
    %v464 = vunpack.c.h.b16 %v149
    %v465 = vunpack.c.l.b16 %v150
    %v466 = vunpack.c.h.b16 %v150
    %v467 = vunpack.c.l.b16 %v151
    %v468 = vunpack.c.h.b16 %v151
    %v469 = vunpack.c.l.b16 %v152
    %v470 = vunpack.c.h.b16 %v152
    %v471 = vunpack.c.l.b16 %v153
    %v472 = vunpack.c.h.b16 %v153
    %v473 = vunpack.c.l.b16 %v154
    %v474 = vunpack.c.h.b16 %v154
    %v475 = vunpack.c.l.b16 %v155
    %v476 = vunpack.c.h.b16 %v155
    %v477 = vunpack.c.l.b16 %v156
    %v478 = vunpack.c.h.b16 %v156
    %v479 = vunpack.c.l.b16 %v157
    %v480 = vunpack.c.h.b16 %v157
    %v481 = vunpack.c.l.b16 %v158
    %v482 = vunpack.c.h.b16 %v158
    %v483 = vunpack.c.l.b16 %v159
    %v484 = vunpack.c.h.b16 %v159
    %v485 = vunpack.c.l.b16 %v160
    %v486 = vunpack.c.h.b16 %v160
    %v487 = vunpack.c.l.b16 %v161
    %v488 = vunpack.c.h.b16 %v161
    %v489 = vunpack.c.l.b16 %v162
    %v490 = vunpack.c.h.b16 %v162
    %v491 = vunpack.c.l.b16 %v163
    %v492 = vunpack.c.h.b16 %v163
    %v493 = vunpack.c.l.b16 %v164
    %v494 = vunpack.c.h.b16 %v164
    %v495 = vunpack.c.l.b16 %v165
    %v496 = vunpack.c.h.b16 %v165
    %v497 = vunpack.c.l.b16 %v166
    %v498 = vunpack.c.h.b16 %v166
    %v499 = vunpack.c.l.b16 %v167
    %v500 = vunpack.c.h.b16 %v167
    %v501 = vunpack.c.l.b16 %v168
    %v502 = vunpack.c.h.b16 %v168
    %v503 = vunpack.c.l.b16 %v169
    %v504 = vunpack.c.h.b16 %v169
    %v505 = vunpack.c.l.b16 %v170
    %v506 = vunpack.c.h.b16 %v170
    %v507 = vunpack.c.l.b16 %v171
    %v508 = vunpack.c.h.b16 %v171
    %v509 = vunpack.c.l.b16 %v172
    %v510 = vunpack.c.h.b16 %v172
    %v511 = vunpack.c.l.b16 %v173
    %v512 = vunpack.c.h.b16 %v173
    %v513 = vunpack.c.l.b16 %v174
    %v514 = vunpack.c.h.b16 %v174
    %v515 = vunpack.c.l.b16 %v175
    %v516 = vunpack.c.h.b16 %v175
    %v517 = vunpack.c.l.b16 %v176
    %v518 = vunpack.c.h.b16 %v176
    %v519 = vunpack.c.l.b16 %v177
    %v520 = vunpack.c.h.b16 %v177
    %v521 = vunpack.c.l.b16 %v178
    %v522 = vunpack.c.h.b16 %v178
    %v523 = vunpack.c.l.b16 %v179
    %v524 = vunpack.c.h.b16 %v179
    %v525 = vunpack.c.l.b16 %v180
    %v526 = vunpack.c.h.b16 %v180
    %v527 = vunpack.c.l.b16 %v181
    %v528 = vunpack.c.h.b16 %v181
    %v529 = vunpack.c.l.b16 %v182
    %v530 = vunpack.c.h.b16 %v182
    %v531 = vunpack.c.l.b16 %v183
    %v532 = vunpack.c.h.b16 %v183
    %v533 = vunpack.c.l.b16 %v184
    %v534 = vunpack.c.h.b16 %v184
    %v535 = vunpack.c.l.b16 %v185
    %v536 = vunpack.c.h.b16 %v185
    %v537 = vunpack.c.l.b16 %v186
    %v538 = vunpack.c.h.b16 %v186
    %v539 = vunpack.c.l.b16 %v187
    %v540 = vunpack.c.h.b16 %v187
    %v541 = vunpack.c.l.b16 %v188
    %v542 = vunpack.c.h.b16 %v188
    %v543 = vunpack.c.l.b16 %v189
    %v544 = vunpack.c.h.b16 %v189
    %v545 = vunpack.c.l.b16 %v190
    %v546 = vunpack.c.h.b16 %v190
    %v547 = vunpack.c.l.b16 %v191
    %v548 = vunpack.c.h.b16 %v191
    %v549 = vunpack.c.l.b16 %v192
    %v550 = vunpack.c.h.b16 %v192
    %v551 = vunpack.c.l.b16 %v193
    %v552 = vunpack.c.h.b16 %v193
    %v553 = vunpack.c.l.b16 %v194
    %v554 = vunpack.c.h.b16 %v194
    %v555 = vunpack.c.l.b16 %v195
    %v556 = vunpack.c.h.b16 %v195
    %v557 = vunpack.c.l.b16 %v196
    %v558 = vunpack.c.h.b16 %v196
    %v559 = vunpack.c.l.b16 %v197
    %v560 = vunpack.c.h.b16 %v197
    %v561 = vunpack.c.l.b16 %v198
    %v562 = vunpack.c.h.b16 %v198
    %v563 = vunpack.c.l.b16 %v199
    %v564 = vunpack.c.h.b16 %v199
    %v565 = vunpack.c.l.b16 %v200
    %v566 = vunpack.c.h.b16 %v200
    %v567 = vunpack.c.l.b16 %v201
    %v568 = vunpack.c.h.b16 %v201
    %v569 = vunpack.c.l.b16 %v202
    %v570 = vunpack.c.h.b16 %v202
    %v571 = vunpack.c.l.b16 %v203
    %v572 = vunpack.c.h.b16 %v203
    %v573 = vunpack.c.l.b16 %v204
    %v574 = vunpack.c.h.b16 %v204
    %v575 = vunpack.c.l.b16 %v205
    %v576 = vunpack.c.h.b16 %v205
    %v577 = vunpack.c.l.b16 %v206
    %v578 = vunpack.c.h.b16 %v206
    %v579 = vunpack.c.l.b16 %v207
    %v580 = vunpack.c.h.b16 %v207
    %v581 = vunpack.c.l.b16 %v208
    %v582 = vunpack.c.h.b16 %v208
    %v583 = vunpack.c.l.b16 %v209
    %v584 = vunpack.c.h.b16 %v209
    %v585 = vunpack.c.l.b16 %v210
    %v586 = vunpack.c.h.b16 %v210
    %v587 = vunpack.c.l.b16 %v211
    %v588 = vunpack.c.h.b16 %v211
    %v589 = vunpack.c.l.b16 %v212
    %v590 = vunpack.c.h.b16 %v212
    %v591 = vunpack.c.l.b16 %v213
    %v592 = vunpack.c.h.b16 %v213
    %v593 = vunpack.c.l.b16 %v214
    %v594 = vunpack.c.h.b16 %v214
    %v595 = vunpack.c.l.b16 %v215
    %v596 = vunpack.c.h.b16 %v215
    %v597 = vunpack.c.l.b16 %v216
    %v598 = vunpack.c.h.b16 %v216
    %v599 = vunpack.c.l.b16 %v217
    %v600 = vunpack.c.h.b16 %v217
    %v601 = vunpack.c.l.b16 %v218
    %v602 = vunpack.c.h.b16 %v218
    %v603 = vunpack.c.l.b16 %v219
    %v604 = vunpack.c.h.b16 %v219
    %v605 = vunpack.c.l.b16 %v220
    %v606 = vunpack.c.h.b16 %v220
    %v607 = vunpack.c.l.b16 %v221
    %v608 = vunpack.c.h.b16 %v221
    %v609 = vunpack.c.l.b16 %v222
    %v610 = vunpack.c.h.b16 %v222
    %v611 = vunpack.c.l.b16 %v223
    %v612 = vunpack.c.h.b16 %v223
    %v613 = vunpack.c.l.b16 %v224
    %v614 = vunpack.c.h.b16 %v224
    %v615 = vunpack.c.l.b16 %v225
    %v616 = vunpack.c.h.b16 %v225
    %v617 = vunpack.c.l.b16 %v226
    %v618 = vunpack.c.h.b16 %v226
    %v619 = vunpack.c.l.b16 %v227
    %v620 = vunpack.c.h.b16 %v227
    %v621 = vunpack.c.l.b16 %v228
    %v622 = vunpack.c.h.b16 %v228
    %v623 = vunpack.c.l.b16 %v229
    %v624 = vunpack.c.h.b16 %v229
    %v625 = vunpack.c.l.b16 %v230
    %v626 = vunpack.c.h.b16 %v230
    %v627 = vunpack.c.l.b16 %v231
    %v628 = vunpack.c.h.b16 %v231
    %v629 = vunpack.c.l.b16 %v232
    %v630 = vunpack.c.h.b16 %v232
    %v631 = vunpack.c.l.b16 %v233
    %v632 = vunpack.c.h.b16 %v233
    %v633 = vunpack.c.l.b16 %v234
    %v634 = vunpack.c.h.b16 %v234
    %v635 = vunpack.c.l.b16 %v235
    %v636 = vunpack.c.h.b16 %v235
    %v637 = vunpack.c.l.b16 %v236
    %v638 = vunpack.c.h.b16 %v236
    %v639 = vunpack.c.l.b16 %v237
    %v640 = vunpack.c.h.b16 %v237
    %v641 = vunpack.c.l.b16 %v238
    %v642 = vunpack.c.h.b16 %v238
    %v643 = vunpack.c.l.b16 %v239
    %v644 = vunpack.c.h.b16 %v239
    %v645 = vunpack.c.l.b16 %v240
    %v646 = vunpack.c.h.b16 %v240
    %v647 = vunpack.c.l.b16 %v241
    %v648 = vunpack.c.h.b16 %v241
    %v649 = vunpack.c.l.b16 %v242
    %v650 = vunpack.c.h.b16 %v242
    %v651 = vunpack.c.l.b16 %v243
    %v652 = vunpack.c.h.b16 %v243
    %v653 = vunpack.c.l.b16 %v244
    %v654 = vunpack.c.h.b16 %v244
    %v655 = vunpack.c.l.b16 %v245
    %v656 = vunpack.c.h.b16 %v245
    %v657 = vunpack.c.l.b16 %v246
    %v658 = vunpack.c.h.b16 %v246
    %v659 = vunpack.c.l.b16 %v247
    %v660 = vunpack.c.h.b16 %v247
    %v661 = vunpack.c.l.b16 %v248
    %v662 = vunpack.c.h.b16 %v248
    %v663 = vunpack.c.l.b16 %v249
    %v664 = vunpack.c.h.b16 %v249
    %v665 = vunpack.c.l.b16 %v250
    %v666 = vunpack.c.h.b16 %v250
    %v667 = vunpack.c.l.b16 %v251
    %v668 = vunpack.c.h.b16 %v251
    %v669 = vunpack.c.l.b16 %v252
    %v670 = vunpack.c.h.b16 %v252
    %v671 = vunpack.c.l.b16 %v253
    %v672 = vunpack.c.h.b16 %v253
    %v673 = vpack.c.b16 %v419, %v417
    %v674 = vpack.c.b16 %v420, %v418
    %v675 = vpack.c.b16 %v423, %v421
    %v676 = vpack.c.b16 %v424, %v422
    %v677 = vpack.c.b16 %v427, %v425
    %v678 = vpack.c.b16 %v428, %v426
    %v679 = vpack.c.b16 %v431, %v429
    %v680 = vpack.c.b16 %v432, %v430
    %v681 = vpack.c.b16 %v435, %v433
    %v682 = vpack.c.b16 %v436, %v434
    %v683 = vpack.c.b16 %v439, %v437
    %v684 = vpack.c.b16 %v440, %v438
    %v685 = vpack.c.b16 %v443, %v441
    %v686 = vpack.c.b16 %v444, %v442
    %v687 = vpack.c.b16 %v447, %v445
    %v688 = vpack.c.b16 %v448, %v446
    %v689 = vpack.c.b16 %v451, %v449
    %v690 = vpack.c.b16 %v452, %v450
    %v691 = vpack.c.b16 %v455, %v453
    %v692 = vpack.c.b16 %v456, %v454
    %v693 = vpack.c.b16 %v459, %v457
    %v694 = vpack.c.b16 %v460, %v458
    %v695 = vpack.c.b16 %v463, %v461
    %v696 = vpack.c.b16 %v464, %v462
    %v697 = vpack.c.b16 %v467, %v465
    %v698 = vpack.c.b16 %v468, %v466
    %v699 = vpack.c.b16 %v471, %v469
    %v700 = vpack.c.b16 %v472, %v470
    %v701 = vpack.c.b16 %v475, %v473
    %v702 = vpack.c.b16 %v476, %v474
    %v703 = vpack.c.b16 %v479, %v477
    %v704 = vpack.c.b16 %v480, %v478
    %v705 = vpack.c.b16 %v483, %v481
    %v706 = vpack.c.b16 %v484, %v482
    %v707 = vpack.c.b16 %v487, %v485
    %v708 = vpack.c.b16 %v488, %v486
    %v709 = vpack.c.b16 %v491, %v489
    %v710 = vpack.c.b16 %v492, %v490
    %v711 = vpack.c.b16 %v495, %v493
    %v712 = vpack.c.b16 %v496, %v494
    %v713 = vpack.c.b16 %v499, %v497
    %v714 = vpack.c.b16 %v500, %v498
    %v715 = vpack.c.b16 %v503, %v501
    %v716 = vpack.c.b16 %v504, %v502
    %v717 = vpack.c.b16 %v507, %v505
    %v718 = vpack.c.b16 %v508, %v506
    %v719 = vpack.c.b16 %v511, %v509
    %v720 = vpack.c.b16 %v512, %v510
    %v721 = vpack.c.b16 %v515, %v513
    %v722 = vpack.c.b16 %v516, %v514
    %v723 = vpack.c.b16 %v519, %v517
    %v724 = vpack.c.b16 %v520, %v518
    %v725 = vpack.c.b16 %v523, %v521
    %v726 = vpack.c.b16 %v524, %v522
    %v727 = vpack.c.b16 %v527, %v525
    %v728 = vpack.c.b16 %v528, %v526
    %v729 = vpack.c.b16 %v531, %v529
    %v730 = vpack.c.b16 %v532, %v530
    %v731 = vpack.c.b16 %v535, %v533
    %v732 = vpack.c.b16 %v536, %v534
    %v733 = vpack.c.b16 %v539, %v537
    %v734 = vpack.c.b16 %v540, %v538
    %v735 = vpack.c.b16 %v543, %v541
    %v736 = vpack.c.b16 %v544, %v542
    %v737 = vpack.c.b16 %v547, %v545
    %v738 = vpack.c.b16 %v548, %v546
    %v739 = vpack.c.b16 %v551, %v549
    %v740 = vpack.c.b16 %v552, %v550
    %v741 = vpack.c.b16 %v555, %v553
    %v742 = vpack.c.b16 %v556, %v554
    %v743 = vpack.c.b16 %v559, %v557
    %v744 = vpack.c.b16 %v560, %v558
    %v745 = vpack.c.b16 %v563, %v561
    %v746 = vpack.c.b16 %v564, %v562
    %v747 = vpack.c.b16 %v567, %v565
    %v748 = vpack.c.b16 %v568, %v566
    %v749 = vpack.c.b16 %v571, %v569
    %v750 = vpack.c.b16 %v572, %v570
    %v751 = vpack.c.b16 %v575, %v573
    %v752 = vpack.c.b16 %v576, %v574
    %v753 = vpack.c.b16 %v579, %v577
    %v754 = vpack.c.b16 %v580, %v578
    %v755 = vpack.c.b16 %v583, %v581
    %v756 = vpack.c.b16 %v584, %v582
    %v757 = vpack.c.b16 %v587, %v585
    %v758 = vpack.c.b16 %v588, %v586
    %v759 = vpack.c.b16 %v591, %v589
    %v760 = vpack.c.b16 %v592, %v590
    %v761 = vpack.c.b16 %v595, %v593
    %v762 = vpack.c.b16 %v596, %v594
    %v763 = vpack.c.b16 %v599, %v597
    %v764 = vpack.c.b16 %v600, %v598
    %v765 = vpack.c.b16 %v603, %v601
    %v766 = vpack.c.b16 %v604, %v602
    %v767 = vpack.c.b16 %v607, %v605
    %v768 = vpack.c.b16 %v608, %v606
    %v769 = vpack.c.b16 %v611, %v609
    %v770 = vpack.c.b16 %v612, %v610
    %v771 = vpack.c.b16 %v615, %v613
    %v772 = vpack.c.b16 %v616, %v614
    %v773 = vpack.c.b16 %v619, %v617
    %v774 = vpack.c.b16 %v620, %v618
    %v775 = vpack.c.b16 %v623, %v621
    %v776 = vpack.c.b16 %v624, %v622
    %v777 = vpack.c.b16 %v627, %v625
    %v778 = vpack.c.b16 %v628, %v626
    %v779 = vpack.c.b16 %v631, %v629
    %v780 = vpack.c.b16 %v632, %v630
    %v781 = vpack.c.b16 %v635, %v633
    %v782 = vpack.c.b16 %v636, %v634
    %v783 = vpack.c.b16 %v639, %v637
    %v784 = vpack.c.b16 %v640, %v638
    %v785 = vpack.c.b16 %v643, %v641
    %v786 = vpack.c.b16 %v644, %v642
    %v787 = vpack.c.b16 %v647, %v645
    %v788 = vpack.c.b16 %v648, %v646
    %v789 = vpack.c.b16 %v651, %v649
    %v790 = vpack.c.b16 %v652, %v650
    %v791 = vpack.c.b16 %v655, %v653
    %v792 = vpack.c.b16 %v656, %v654
    %v793 = vpack.c.b16 %v659, %v657
    %v794 = vpack.c.b16 %v660, %v658
    %v795 = vpack.c.b16 %v663, %v661
    %v796 = vpack.c.b16 %v664, %v662
    %v797 = vpack.c.b16 %v667, %v665
    %v798 = vpack.c.b16 %v668, %v666
    %v799 = vpack.c.b16 %v671, %v669
    %v800 = vpack.c.b16 %v672, %v670
    %929 = vmatpush.bf16.msra.mxu0 %v687
    %930 = vmatpush.bf16.msra.mxu0 %v685
    %931 = vmatpush.bf16.msra.mxu0 %v683
    %932 = vmatpush.bf16.msra.mxu0 %v681
    %933 = vmatpush.bf16.msra.mxu0 %v679
    %934 = vmatpush.bf16.msra.mxu0 %v677
    %935 = vmatpush.bf16.msra.mxu0 %v675
    %936 = vmatpush.bf16.msra.mxu0 %v673
    %937 = vmatmul.bf16.gmra.mxu0 %v275
    %v938 = vpop.f32.mrf.mxu0
    %v939 = vadd.f32 %v285, %v938
    %v940 = vpop.f32.mrf.mxu0
    %941 = vdwg.mxu0
    %942 = vmatpush.bf16.msra.mxu0 %v703
    %943 = vmatpush.bf16.msra.mxu0 %v701
    %944 = vmatpush.bf16.msra.mxu0 %v699
    %945 = vmatpush.bf16.msra.mxu0 %v697
    %946 = vmatpush.bf16.msra.mxu0 %v695
    %947 = vmatpush.bf16.msra.mxu0 %v693
    %948 = vmatpush.bf16.msra.mxu0 %v691
    %949 = vmatpush.bf16.msra.mxu0 %v689
    %950 = vmatmul.bf16.gmra.mxu0 %v276
    %v951 = vpop.f32.mrf.mxu0
    %v952 = vadd.f32 %v939, %v951
    %v953 = vpop.f32.mrf.mxu0
    %954 = vdwg.mxu0
    %955 = vmatpush.bf16.msra.mxu0 %v719
    %956 = vmatpush.bf16.msra.mxu0 %v717
    %957 = vmatpush.bf16.msra.mxu0 %v715
    %958 = vmatpush.bf16.msra.mxu0 %v713
    %959 = vmatpush.bf16.msra.mxu0 %v711
    %960 = vmatpush.bf16.msra.mxu0 %v709
    %961 = vmatpush.bf16.msra.mxu0 %v707
    %962 = vmatpush.bf16.msra.mxu0 %v705
    %963 = vmatmul.bf16.gmra.mxu0 %v277
    %v964 = vpop.f32.mrf.mxu0
    %v965 = vadd.f32 %v952, %v964
    %v966 = vpop.f32.mrf.mxu0
    %967 = vdwg.mxu0
    %968 = vmatpush.bf16.msra.mxu0 %v735
    %969 = vmatpush.bf16.msra.mxu0 %v733
    %970 = vmatpush.bf16.msra.mxu0 %v731
    %971 = vmatpush.bf16.msra.mxu0 %v729
    %972 = vmatpush.bf16.msra.mxu0 %v727
    %973 = vmatpush.bf16.msra.mxu0 %v725
    %974 = vmatpush.bf16.msra.mxu0 %v723
    %975 = vmatpush.bf16.msra.mxu0 %v721
    %976 = vmatmul.bf16.gmra.mxu0 %v278
    %v977 = vpop.f32.mrf.mxu0
    %v978 = vadd.f32 %v965, %v977
    %v979 = vpop.f32.mrf.mxu0
    %980 = vdwg.mxu0
    %981 = vmatpush.bf16.msra.mxu0 %v751
    %982 = vmatpush.bf16.msra.mxu0 %v749
    %983 = vmatpush.bf16.msra.mxu0 %v747
    %984 = vmatpush.bf16.msra.mxu0 %v745
    %985 = vmatpush.bf16.msra.mxu0 %v743
    %986 = vmatpush.bf16.msra.mxu0 %v741
    %987 = vmatpush.bf16.msra.mxu0 %v739
    %988 = vmatpush.bf16.msra.mxu0 %v737
    %989 = vmatmul.bf16.gmra.mxu0 %v279
    %v990 = vpop.f32.mrf.mxu0
    %v991 = vadd.f32 %v978, %v990
    %v992 = vpop.f32.mrf.mxu0
    %993 = vdwg.mxu0
    %994 = vmatpush.bf16.msra.mxu0 %v767
    %995 = vmatpush.bf16.msra.mxu0 %v765
    %996 = vmatpush.bf16.msra.mxu0 %v763
    %997 = vmatpush.bf16.msra.mxu0 %v761
    %998 = vmatpush.bf16.msra.mxu0 %v759
    %999 = vmatpush.bf16.msra.mxu0 %v757
    %1000 = vmatpush.bf16.msra.mxu0 %v755
    %1001 = vmatpush.bf16.msra.mxu0 %v753
    %1002 = vmatmul.bf16.gmra.mxu0 %v280
    %v1003 = vpop.f32.mrf.mxu0
    %v1004 = vadd.f32 %v991, %v1003
    %v1005 = vpop.f32.mrf.mxu0
    %1006 = vdwg.mxu0
    %1007 = vmatpush.bf16.msra.mxu0 %v783
    %1008 = vmatpush.bf16.msra.mxu0 %v781
    %1009 = vmatpush.bf16.msra.mxu0 %v779
    %1010 = vmatpush.bf16.msra.mxu0 %v777
    %1011 = vmatpush.bf16.msra.mxu0 %v775
    %1012 = vmatpush.bf16.msra.mxu0 %v773
    %1013 = vmatpush.bf16.msra.mxu0 %v771
    %1014 = vmatpush.bf16.msra.mxu0 %v769
    %1015 = vmatmul.bf16.gmra.mxu0 %v281
    %v1016 = vpop.f32.mrf.mxu0
    %v1017 = vadd.f32 %v1004, %v1016
    %v1018 = vpop.f32.mrf.mxu0
    %1019 = vdwg.mxu0
    %1020 = vmatpush.bf16.msra.mxu0 %v799
    %1021 = vmatpush.bf16.msra.mxu0 %v797
    %1022 = vmatpush.bf16.msra.mxu0 %v795
    %1023 = vmatpush.bf16.msra.mxu0 %v793
    %1024 = vmatpush.bf16.msra.mxu0 %v791
    %1025 = vmatpush.bf16.msra.mxu0 %v789
    %1026 = vmatpush.bf16.msra.mxu0 %v787
    %1027 = vmatpush.bf16.msra.mxu0 %v785
    %1028 = vmatmul.bf16.gmra.mxu0 %v282
    %v1029 = vpop.f32.mrf.mxu0
    %v1030 = vadd.f32 %v1017, %v1029
    %v1031 = vpop.f32.mrf.mxu0
    %1032 = vdwg.mxu0
    %1033 = vmatpush.bf16.msra.mxu0 %v688
    %1034 = vmatpush.bf16.msra.mxu0 %v686
    %1035 = vmatpush.bf16.msra.mxu0 %v684
    %1036 = vmatpush.bf16.msra.mxu0 %v682
    %1037 = vmatpush.bf16.msra.mxu0 %v680
    %1038 = vmatpush.bf16.msra.mxu0 %v678
    %1039 = vmatpush.bf16.msra.mxu0 %v676
    %1040 = vmatpush.bf16.msra.mxu0 %v674
    %1041 = vmatmul.bf16.gmra.mxu0 %v275
    %v1042 = vpop.f32.mrf.mxu0
    %v1043 = vadd.f32 %v286, %v1042
    %v1044 = vpop.f32.mrf.mxu0
    %1045 = vdwg.mxu0
    %1046 = vmatpush.bf16.msra.mxu0 %v704
    %1047 = vmatpush.bf16.msra.mxu0 %v702
    %1048 = vmatpush.bf16.msra.mxu0 %v700
    %1049 = vmatpush.bf16.msra.mxu0 %v698
    %1050 = vmatpush.bf16.msra.mxu0 %v696
    %1051 = vmatpush.bf16.msra.mxu0 %v694
    %1052 = vmatpush.bf16.msra.mxu0 %v692
    %1053 = vmatpush.bf16.msra.mxu0 %v690
    %1054 = vmatmul.bf16.gmra.mxu0 %v276
    %v1055 = vpop.f32.mrf.mxu0
    %v1056 = vadd.f32 %v1043, %v1055
    %v1057 = vpop.f32.mrf.mxu0
    %1058 = vdwg.mxu0
    %1059 = vmatpush.bf16.msra.mxu0 %v720
    %1060 = vmatpush.bf16.msra.mxu0 %v718
    %1061 = vmatpush.bf16.msra.mxu0 %v716
    %1062 = vmatpush.bf16.msra.mxu0 %v714
    %1063 = vmatpush.bf16.msra.mxu0 %v712
    %1064 = vmatpush.bf16.msra.mxu0 %v710
    %1065 = vmatpush.bf16.msra.mxu0 %v708
    %1066 = vmatpush.bf16.msra.mxu0 %v706
    %1067 = vmatmul.bf16.gmra.mxu0 %v277
    %v1068 = vpop.f32.mrf.mxu0
    %v1069 = vadd.f32 %v1056, %v1068
    %v1070 = vpop.f32.mrf.mxu0
    %1071 = vdwg.mxu0
    %1072 = vmatpush.bf16.msra.mxu0 %v736
    %1073 = vmatpush.bf16.msra.mxu0 %v734
    %1074 = vmatpush.bf16.msra.mxu0 %v732
    %1075 = vmatpush.bf16.msra.mxu0 %v730
    %1076 = vmatpush.bf16.msra.mxu0 %v728
    %1077 = vmatpush.bf16.msra.mxu0 %v726
    %1078 = vmatpush.bf16.msra.mxu0 %v724
    %1079 = vmatpush.bf16.msra.mxu0 %v722
    %1080 = vmatmul.bf16.gmra.mxu0 %v278
    %v1081 = vpop.f32.mrf.mxu0
    %v1082 = vadd.f32 %v1069, %v1081
    %v1083 = vpop.f32.mrf.mxu0
    %1084 = vdwg.mxu0
    %1085 = vmatpush.bf16.msra.mxu0 %v752
    %1086 = vmatpush.bf16.msra.mxu0 %v750
    %1087 = vmatpush.bf16.msra.mxu0 %v748
    %1088 = vmatpush.bf16.msra.mxu0 %v746
    %1089 = vmatpush.bf16.msra.mxu0 %v744
    %1090 = vmatpush.bf16.msra.mxu0 %v742
    %1091 = vmatpush.bf16.msra.mxu0 %v740
    %1092 = vmatpush.bf16.msra.mxu0 %v738
    %1093 = vmatmul.bf16.gmra.mxu0 %v279
    %v1094 = vpop.f32.mrf.mxu0
    %v1095 = vadd.f32 %v1082, %v1094
    %v1096 = vpop.f32.mrf.mxu0
    %1097 = vdwg.mxu0
    %1098 = vmatpush.bf16.msra.mxu0 %v768
    %1099 = vmatpush.bf16.msra.mxu0 %v766
    %1100 = vmatpush.bf16.msra.mxu0 %v764
    %1101 = vmatpush.bf16.msra.mxu0 %v762
    %1102 = vmatpush.bf16.msra.mxu0 %v760
    %1103 = vmatpush.bf16.msra.mxu0 %v758
    %1104 = vmatpush.bf16.msra.mxu0 %v756
    %1105 = vmatpush.bf16.msra.mxu0 %v754
    %1106 = vmatmul.bf16.gmra.mxu0 %v280
    %v1107 = vpop.f32.mrf.mxu0
    %v1108 = vadd.f32 %v1095, %v1107
    %v1109 = vpop.f32.mrf.mxu0
    %1110 = vdwg.mxu0
    %1111 = vmatpush.bf16.msra.mxu0 %v784
    %1112 = vmatpush.bf16.msra.mxu0 %v782
    %1113 = vmatpush.bf16.msra.mxu0 %v780
    %1114 = vmatpush.bf16.msra.mxu0 %v778
    %1115 = vmatpush.bf16.msra.mxu0 %v776
    %1116 = vmatpush.bf16.msra.mxu0 %v774
    %1117 = vmatpush.bf16.msra.mxu0 %v772
    %1118 = vmatpush.bf16.msra.mxu0 %v770
    %1119 = vmatmul.bf16.gmra.mxu0 %v281
    %v1120 = vpop.f32.mrf.mxu0
    %v1121 = vadd.f32 %v1108, %v1120
    %v1122 = vpop.f32.mrf.mxu0
    %1123 = vdwg.mxu0
    %1124 = vmatpush.bf16.msra.mxu0 %v800
    %1125 = vmatpush.bf16.msra.mxu0 %v798
    %1126 = vmatpush.bf16.msra.mxu0 %v796
    %1127 = vmatpush.bf16.msra.mxu0 %v794
    %1128 = vmatpush.bf16.msra.mxu0 %v792
    %1129 = vmatpush.bf16.msra.mxu0 %v790
    %1130 = vmatpush.bf16.msra.mxu0 %v788
    %1131 = vmatpush.bf16.msra.mxu0 %v786
    %1132 = vmatmul.bf16.gmra.mxu0 %v282
    %v1133 = vpop.f32.mrf.mxu0
    %v1134 = vadd.f32 %v1121, %v1133
    %v1135 = vpop.f32.mrf.mxu0
    %1136 = vdwg.mxu0
    %vm1137 = vcmp.gt.f32.partialorder %v1030, 0.0
    %vm1138 = vcmp.gt.f32.partialorder %v1134, 0.0
    %v1139 = vmul.f32 %v1030, 0.01
    %v1140 = vmul.f32 %v1134, 0.01
    %v1141 = vsel %vm1137, %v1030, %v1139
    %v1142 = vsel %vm1138, %v1134, %v1140
    %v1143 = vld [vmem:[#allocation4] sm:$0xff]
    %v1144 = vld [vmem:[#allocation4 + $0x8] sm:$0xff]
    %v1145 = vld [vmem:[#allocation4 + $0x10] sm:$0xff]
    %v1146 = vld [vmem:[#allocation4 + $0x18] sm:$0xff]
    %v1147 = vld [vmem:[#allocation4 + $0x20] sm:$0xff]
    %v1148 = vld [vmem:[#allocation4 + $0x28] sm:$0xff]
    %v1149 = vld [vmem:[#allocation4 + $0x30] sm:$0xff]
    %v1150 = vld [vmem:[#allocation4 + $0x38] sm:$0xff]
    %v1151 = vld [vmem:[#allocation4 + $0x40] sm:$0xff]
    %v1152 = vld [vmem:[#allocation4 + $0x48] sm:$0xff]
    %v1153 = vld [vmem:[#allocation4 + $0x50] sm:$0xff]
    %v1154 = vld [vmem:[#allocation4 + $0x58] sm:$0xff]
    %v1155 = vld [vmem:[#allocation4 + $0x60] sm:$0xff]
    %v1156 = vld [vmem:[#allocation4 + $0x68] sm:$0xff]
    %v1157 = vld [vmem:[#allocation4 + $0x70] sm:$0xff]
    %v1158 = vld [vmem:[#allocation4 + $0x78] sm:$0xff]
    %v1159 = vld [vmem:[#allocation4 + $0x80] sm:$0xff]
    %v1160 = vld [vmem:[#allocation4 + $0x88] sm:$0xff]
    %v1161 = vld [vmem:[#allocation4 + $0x90] sm:$0xff]
    %v1162 = vld [vmem:[#allocation4 + $0x98] sm:$0xff]
    %v1163 = vld [vmem:[#allocation4 + $0xa0] sm:$0xff]
    %v1164 = vld [vmem:[#allocation4 + $0xa8] sm:$0xff]
    %v1165 = vld [vmem:[#allocation4 + $0xb0] sm:$0xff]
    %v1166 = vld [vmem:[#allocation4 + $0xb8] sm:$0xff]
    %v1167 = vld [vmem:[#allocation4 + $0xc0] sm:$0xff]
    %v1168 = vld [vmem:[#allocation4 + $0xc8] sm:$0xff]
    %v1169 = vld [vmem:[#allocation4 + $0xd0] sm:$0xff]
    %v1170 = vld [vmem:[#allocation4 + $0xd8] sm:$0xff]
    %v1171 = vld [vmem:[#allocation4 + $0xe0] sm:$0xff]
    %v1172 = vld [vmem:[#allocation4 + $0xe8] sm:$0xff]
    %v1173 = vld [vmem:[#allocation4 + $0xf0] sm:$0xff]
    %v1174 = vld [vmem:[#allocation4 + $0xf8] sm:$0xff]
    %v1175 = vld [vmem:[%s5] sm:$0x1]
    %v1177 = vperm.slane %v1175, 0
    %1179 = vmatpush.msra.mxu0 %v1158
    %1180 = vmatpush.msra.mxu0 %v1157
    %1181 = vmatpush.msra.mxu0 %v1156
    %1182 = vmatpush.msra.mxu0 %v1155
    %1183 = vmatpush.msra.mxu0 %v1154
    %1184 = vmatpush.msra.mxu0 %v1153
    %1185 = vmatpush.msra.mxu0 %v1152
    %1186 = vmatpush.msra.mxu0 %v1151
    %1187 = vmatpush.msra.mxu0 %v1150
    %1188 = vmatpush.msra.mxu0 %v1149
    %1189 = vmatpush.msra.mxu0 %v1148
    %1190 = vmatpush.msra.mxu0 %v1147
    %1191 = vmatpush.msra.mxu0 %v1146
    %1192 = vmatpush.msra.mxu0 %v1145
    %1193 = vmatpush.msra.mxu0 %v1144
    %1194 = vmatpush.msra.mxu0 %v1143
    %1195 = vmatmul.f32.gmra.mxu0 %v1141
    %v1196 = vpop.f32.mrf.mxu0
    %v1197 = vadd.f32 %v1177, %v1196
    %1198 = vdwg.mxu0
    %1199 = vmatpush.msra.mxu0 %v1174
    %1200 = vmatpush.msra.mxu0 %v1173
    %1201 = vmatpush.msra.mxu0 %v1172
    %1202 = vmatpush.msra.mxu0 %v1171
    %1203 = vmatpush.msra.mxu0 %v1170
    %1204 = vmatpush.msra.mxu0 %v1169
    %1205 = vmatpush.msra.mxu0 %v1168
    %1206 = vmatpush.msra.mxu0 %v1167
    %1207 = vmatpush.msra.mxu0 %v1166
    %1208 = vmatpush.msra.mxu0 %v1165
    %1209 = vmatpush.msra.mxu0 %v1164
    %1210 = vmatpush.msra.mxu0 %v1163
    %1211 = vmatpush.msra.mxu0 %v1162
    %1212 = vmatpush.msra.mxu0 %v1161
    %1213 = vmatpush.msra.mxu0 %v1160
    %1214 = vmatpush.msra.mxu0 %v1159
    %1215 = vmatmul.f32.gmra.mxu0 %v1142
    %v1216 = vpop.f32.mrf.mxu0
    %v1217 = vadd.f32 %v1197, %v1216
    %1218 = vdwg.mxu0
    %vm1219 = vcmp.gt.f32.partialorder %v1217, 0.0
    %v1220 = vmul.f32 %v1217, 0.01
    %v1221 = vsel %vm1219, %v1217, %v1220
    %v1222 = vld [vmem:[%s6] sm:$0xff]
    %v1223 = vld [vmem:[%s6 + $0x8] sm:$0xff]
    %v1224 = vld [vmem:[%s6 + $0x10] sm:$0xff]
    %v1225 = vld [vmem:[%s6 + $0x18] sm:$0xff]
    %v1226 = vld [vmem:[%s6 + $0x20] sm:$0xff]
    %v1227 = vld [vmem:[%s6 + $0x28] sm:$0xff]
    %v1228 = vld [vmem:[%s6 + $0x30] sm:$0xff]
    %v1229 = vld [vmem:[%s6 + $0x38] sm:$0xff]
    %v1230 = vld [vmem:[%s6 + $0x40] sm:$0xff]
    %v1231 = vld [vmem:[%s6 + $0x48] sm:$0xff]
    %v1232 = vld [vmem:[%s6 + $0x50] sm:$0xff]
    %v1233 = vld [vmem:[%s6 + $0x58] sm:$0xff]
    %v1234 = vld [vmem:[%s6 + $0x60] sm:$0xff]
    %v1235 = vld [vmem:[%s6 + $0x68] sm:$0xff]
    %v1236 = vld [vmem:[%s6 + $0x70] sm:$0xff]
    %v1237 = vld [vmem:[%s6 + $0x78] sm:$0xff]
    %v1238 = vld [vmem:[%s7] sm:$0x1]
    %v1240 = vperm.slane %v1238, 0
    %1242 = vmatpush.msra.mxu0 %v1237
    %1243 = vmatpush.msra.mxu0 %v1236
    %1244 = vmatpush.msra.mxu0 %v1235
    %1245 = vmatpush.msra.mxu0 %v1234
    %1246 = vmatpush.msra.mxu0 %v1233
    %1247 = vmatpush.msra.mxu0 %v1232
    %1248 = vmatpush.msra.mxu0 %v1231
    %1249 = vmatpush.msra.mxu0 %v1230
    %1250 = vmatpush.msra.mxu0 %v1229
    %1251 = vmatpush.msra.mxu0 %v1228
    %1252 = vmatpush.msra.mxu0 %v1227
    %1253 = vmatpush.msra.mxu0 %v1226
    %1254 = vmatpush.msra.mxu0 %v1225
    %1255 = vmatpush.msra.mxu0 %v1224
    %1256 = vmatpush.msra.mxu0 %v1223
    %1257 = vmatpush.msra.mxu0 %v1222
    %1258 = vmatmul.f32.gmra.mxu0 %v1221
    %v1259 = vpop.f32.mrf.mxu0
    %v1260 = vadd.f32 %v1240, %v1259
    %1261 = vdwg.mxu0
    %vm1262 = vcmp.gt.f32.partialorder %v1260, 0.0
    %v1263 = vmul.f32 %v1260, 0.01
    %v1264 = vsel %vm1262, %v1260, %v1263
    %v1265 = vld [vmem:[%s8] sm:$0xff]
    %v1266 = vld [vmem:[%s8 + $0x8] sm:$0xff]
    %v1267 = vld [vmem:[%s8 + $0x10] sm:$0xff]
    %v1268 = vld [vmem:[%s8 + $0x18] sm:$0xff]
    %v1269 = vld [vmem:[%s8 + $0x20] sm:$0xff]
    %v1270 = vld [vmem:[%s8 + $0x28] sm:$0xff]
    %v1271 = vld [vmem:[%s8 + $0x30] sm:$0xff]
    %v1272 = vld [vmem:[%s8 + $0x38] sm:$0xff]
    %v1273 = vld [vmem:[%s9] sm:$0x1]
    %v1275 = vperm.slane %v1273, 0
    %vm1277 = vcmask 523264
    %v1279 = vsel %vm1277, %v1264, 0
    %1281 = vmatpush.msra.mxu0 0.0
    %1282 = vmatpush.msra.mxu0 0.0
    %1283 = vmatpush.msra.mxu0 0.0
    %1284 = vmatpush.msra.mxu0 0.0
    %1285 = vmatpush.msra.mxu0 0.0
    %1286 = vmatpush.msra.mxu0 0.0
    %1287 = vmatpush.msra.mxu0 0.0
    %1288 = vmatpush.msra.mxu0 0.0
    %1289 = vmatpush.msra.mxu0 %v1272
    %1290 = vmatpush.msra.mxu0 %v1271
    %1291 = vmatpush.msra.mxu0 %v1270
    %1292 = vmatpush.msra.mxu0 %v1269
    %1293 = vmatpush.msra.mxu0 %v1268
    %1294 = vmatpush.msra.mxu0 %v1267
    %1295 = vmatpush.msra.mxu0 %v1266
    %1296 = vmatpush.msra.mxu0 %v1265
    %1297 = vmatmul.f32.gmra.mxu0 %v1279
    %v1298 = vpop.f32.mrf.mxu0
    %v1299 = vadd.f32 %v1275, %v1298
    %1300 = vdwg.mxu0
    %vm1301 = vcmask 123904
    %1302 = vst.msk [vmem:[%s19] sm:$0x3] %vm1301, %v1299
    %v1303 = vmul.f32 %v1299, 0.5
    %v1304 = vmul.f32 %v1303, 1.442695
    %v1305 = vpow.pop %v1304
    %v1306 = vld [vmem:[%s1] sm:$0x3]
    %1308 = vrot.lane.b32.xlu0 %v1305, 120
    %v1309 = vpop.permute.xlu0 %1308
    %v1311 = vmul.f32 %v1306, %v1309
    %v1312 = vadd.f32 %v1299, %v1311
    %v1313 = vld [vmem:[%s10] sm:$0xff]
    %v1314 = vld [vmem:[%s11] sm:$0x1]
    %v1316 = vperm.slane %v1314, 0
    %vm1318 = vcmask 64512
    %v1320 = vsel %vm1318, %v1312, 0
    %1322 = vmatpush.msra.mxu0 0.0
    %1323 = vmatpush.msra.mxu0 0.0
    %1324 = vmatpush.msra.mxu0 0.0
    %1325 = vmatpush.msra.mxu0 0.0
    %1326 = vmatpush.msra.mxu0 0.0
    %1327 = vmatpush.msra.mxu0 0.0
    %1328 = vmatpush.msra.mxu0 0.0
    %1329 = vmatpush.msra.mxu0 0.0
    %1330 = vmatpush.msra.mxu0 0.0
    %1331 = vmatpush.msra.mxu0 0.0
    %1332 = vmatpush.msra.mxu0 0.0
    %1333 = vmatpush.msra.mxu0 0.0
    %1334 = vmatpush.msra.mxu0 0.0
    %1335 = vmatpush.msra.mxu0 0.0
    %1336 = vmatpush.msra.mxu0 0.0
    %1337 = vmatpush.msra.mxu0 %v1313
    %1338 = vmatmul.f32.gmra.mxu0 %v1320
    %v1339 = vpop.f32.mrf.mxu0
    %v1340 = vadd.f32 %v1316, %v1339
    %1341 = vdwg.mxu0
    %vm1342 = vcmp.gt.f32.partialorder %v1340, 0.0
    %v1343 = vmul.f32 %v1340, 0.01
    %v1344 = vsel %vm1342, %v1340, %v1343
    %v1345 = vld [vmem:[%s12] sm:$0xff]
    %v1346 = vld [vmem:[%s12 + $0x8] sm:$0xff]
    %v1347 = vld [vmem:[%s12 + $0x10] sm:$0xff]
    %v1348 = vld [vmem:[%s12 + $0x18] sm:$0xff]
    %v1349 = vld [vmem:[%s12 + $0x20] sm:$0xff]
    %v1350 = vld [vmem:[%s12 + $0x28] sm:$0xff]
    %v1351 = vld [vmem:[%s12 + $0x30] sm:$0xff]
    %v1352 = vld [vmem:[%s12 + $0x38] sm:$0xff]
    %v1353 = vld [vmem:[%s13] sm:$0x1]
    %v1355 = vperm.slane %v1353, 0
    %v1358 = vsel %vm1277, %v1344, 0
    %1360 = vmatpush.msra.mxu0 0.0
    %1361 = vmatpush.msra.mxu0 0.0
    %1362 = vmatpush.msra.mxu0 0.0
    %1363 = vmatpush.msra.mxu0 0.0
    %1364 = vmatpush.msra.mxu0 0.0
    %1365 = vmatpush.msra.mxu0 0.0
    %1366 = vmatpush.msra.mxu0 0.0
    %1367 = vmatpush.msra.mxu0 0.0
    %1368 = vmatpush.msra.mxu0 %v1352
    %1369 = vmatpush.msra.mxu0 %v1351
    %1370 = vmatpush.msra.mxu0 %v1350
    %1371 = vmatpush.msra.mxu0 %v1349
    %1372 = vmatpush.msra.mxu0 %v1348
    %1373 = vmatpush.msra.mxu0 %v1347
    %1374 = vmatpush.msra.mxu0 %v1346
    %1375 = vmatpush.msra.mxu0 %v1345
    %1376 = vmatmul.f32.gmra.mxu0 %v1358
    %v1377 = vpop.f32.mrf.mxu0
    %v1378 = vadd.f32 %v1355, %v1377
    %1379 = vdwg.mxu0
    %vm1380 = vcmp.gt.f32.partialorder %v1378, 0.0
    %v1381 = vmul.f32 %v1378, 0.01
    %v1382 = vsel %vm1380, %v1378, %v1381
    %v1383 = vld [vmem:[#allocation6] sm:$0xff]
    %v1384 = vld [vmem:[#allocation6 + $0x8] sm:$0xff]
    %v1385 = vld [vmem:[#allocation6 + $0x10] sm:$0xff]
    %v1386 = vld [vmem:[#allocation6 + $0x18] sm:$0xff]
    %v1387 = vld [vmem:[#allocation6 + $0x20] sm:$0xff]
    %v1388 = vld [vmem:[#allocation6 + $0x28] sm:$0xff]
    %v1389 = vld [vmem:[#allocation6 + $0x30] sm:$0xff]
    %v1390 = vld [vmem:[#allocation6 + $0x38] sm:$0xff]
    %v1391 = vld [vmem:[#allocation6 + $0x40] sm:$0xff]
    %v1392 = vld [vmem:[#allocation6 + $0x48] sm:$0xff]
    %v1393 = vld [vmem:[#allocation6 + $0x50] sm:$0xff]
    %v1394 = vld [vmem:[#allocation6 + $0x58] sm:$0xff]
    %v1395 = vld [vmem:[#allocation6 + $0x60] sm:$0xff]
    %v1396 = vld [vmem:[#allocation6 + $0x68] sm:$0xff]
    %v1397 = vld [vmem:[#allocation6 + $0x70] sm:$0xff]
    %v1398 = vld [vmem:[#allocation6 + $0x78] sm:$0xff]
    %v1399 = vld [vmem:[#allocation6 + $0x80] sm:$0xff]
    %v1400 = vld [vmem:[#allocation6 + $0x88] sm:$0xff]
    %v1401 = vld [vmem:[#allocation6 + $0x90] sm:$0xff]
    %v1402 = vld [vmem:[#allocation6 + $0x98] sm:$0xff]
    %v1403 = vld [vmem:[#allocation6 + $0xa0] sm:$0xff]
    %v1404 = vld [vmem:[#allocation6 + $0xa8] sm:$0xff]
    %v1405 = vld [vmem:[#allocation6 + $0xb0] sm:$0xff]
    %v1406 = vld [vmem:[#allocation6 + $0xb8] sm:$0xff]
    %v1407 = vld [vmem:[#allocation6 + $0xc0] sm:$0xff]
    %v1408 = vld [vmem:[#allocation6 + $0xc8] sm:$0xff]
    %v1409 = vld [vmem:[#allocation6 + $0xd0] sm:$0xff]
    %v1410 = vld [vmem:[#allocation6 + $0xd8] sm:$0xff]
    %v1411 = vld [vmem:[#allocation6 + $0xe0] sm:$0xff]
    %v1412 = vld [vmem:[#allocation6 + $0xe8] sm:$0xff]
    %v1413 = vld [vmem:[#allocation6 + $0xf0] sm:$0xff]
    %v1414 = vld [vmem:[#allocation6 + $0xf8] sm:$0xff]
    %v1415 = vld [vmem:[%s15] sm:$0x3]
    %v1417 = vperm.slane %v1415, 0
    %v1418 = vperm.slane %v1415, 1
    %1421 = vmatpush.msra.mxu0 %v1413
    %1422 = vmatpush.msra.mxu0 %v1411
    %1423 = vmatpush.msra.mxu0 %v1409
    %1424 = vmatpush.msra.mxu0 %v1407
    %1425 = vmatpush.msra.mxu0 %v1405
    %1426 = vmatpush.msra.mxu0 %v1403
    %1427 = vmatpush.msra.mxu0 %v1401
    %1428 = vmatpush.msra.mxu0 %v1399
    %1429 = vmatpush.msra.mxu0 %v1397
    %1430 = vmatpush.msra.mxu0 %v1395
    %1431 = vmatpush.msra.mxu0 %v1393
    %1432 = vmatpush.msra.mxu0 %v1391
    %1433 = vmatpush.msra.mxu0 %v1389
    %1434 = vmatpush.msra.mxu0 %v1387
    %1435 = vmatpush.msra.mxu0 %v1385
    %1436 = vmatpush.msra.mxu0 %v1383
    %1437 = vmatmul.f32.gmra.mxu0 %v1382
    %v1438 = vpop.f32.mrf.mxu0
    %v1439 = vadd.f32 %v1417, %v1438
    %1440 = vdwg.mxu0
    %1441 = vmatpush.msra.mxu0 %v1414
    %1442 = vmatpush.msra.mxu0 %v1412
    %1443 = vmatpush.msra.mxu0 %v1410
    %1444 = vmatpush.msra.mxu0 %v1408
    %1445 = vmatpush.msra.mxu0 %v1406
    %1446 = vmatpush.msra.mxu0 %v1404
    %1447 = vmatpush.msra.mxu0 %v1402
    %1448 = vmatpush.msra.mxu0 %v1400
    %1449 = vmatpush.msra.mxu0 %v1398
    %1450 = vmatpush.msra.mxu0 %v1396
    %1451 = vmatpush.msra.mxu0 %v1394
    %1452 = vmatpush.msra.mxu0 %v1392
    %1453 = vmatpush.msra.mxu0 %v1390
    %1454 = vmatpush.msra.mxu0 %v1388
    %1455 = vmatpush.msra.mxu0 %v1386
    %1456 = vmatpush.msra.mxu0 %v1384
    %1457 = vmatmul.f32.gmra.mxu0 %v1382
    %v1458 = vpop.f32.mrf.mxu0
    %v1459 = vadd.f32 %v1418, %v1458
    %1460 = vdwg.mxu0
    %vm1461 = vcmp.gt.f32.partialorder %v1439, 0.0
    %vm1462 = vcmp.gt.f32.partialorder %v1459, 0.0
    %v1463 = vmul.f32 %v1439, 0.01
    %v1464 = vmul.f32 %v1459, 0.01
    %v1465 = vsel %vm1461, %v1439, %v1463
    %v1466 = vsel %vm1462, %v1459, %v1464
    %v1467 = vld [vmem:[#allocation7] sm:$0xff]
    %v1468 = vld [vmem:[#allocation7 + $0x8] sm:$0xff]
    %v1469 = vld [vmem:[#allocation7 + $0x10] sm:$0xff]
    %v1470 = vld [vmem:[#allocation7 + $0x18] sm:$0xff]
    %v1471 = vld [vmem:[#allocation7 + $0x20] sm:$0xff]
    %v1472 = vld [vmem:[#allocation7 + $0x28] sm:$0xff]
    %v1473 = vld [vmem:[#allocation7 + $0x30] sm:$0xff]
    %v1474 = vld [vmem:[#allocation7 + $0x38] sm:$0xff]
    %v1475 = vld [vmem:[#allocation7 + $0x40] sm:$0xff]
    %v1476 = vld [vmem:[#allocation7 + $0x48] sm:$0xff]
    %v1477 = vld [vmem:[#allocation7 + $0x50] sm:$0xff]
    %v1478 = vld [vmem:[#allocation7 + $0x58] sm:$0xff]
    %v1479 = vld [vmem:[#allocation7 + $0x60] sm:$0xff]
    %v1480 = vld [vmem:[#allocation7 + $0x68] sm:$0xff]
    %v1481 = vld [vmem:[#allocation7 + $0x70] sm:$0xff]
    %v1482 = vld [vmem:[#allocation7 + $0x78] sm:$0xff]
    %v1483 = vld [vmem:[#allocation7 + $0x80] sm:$0xff]
    %v1484 = vld [vmem:[#allocation7 + $0x88] sm:$0xff]
    %v1485 = vld [vmem:[#allocation7 + $0x90] sm:$0xff]
    %v1486 = vld [vmem:[#allocation7 + $0x98] sm:$0xff]
    %v1487 = vld [vmem:[#allocation7 + $0xa0] sm:$0xff]
    %v1488 = vld [vmem:[#allocation7 + $0xa8] sm:$0xff]
    %v1489 = vld [vmem:[#allocation7 + $0xb0] sm:$0xff]
    %v1490 = vld [vmem:[#allocation7 + $0xb8] sm:$0xff]
    %v1491 = vld [vmem:[#allocation7 + $0xc0] sm:$0xff]
    %v1492 = vld [vmem:[#allocation7 + $0xc8] sm:$0xff]
    %v1493 = vld [vmem:[#allocation7 + $0xd0] sm:$0xff]
    %v1494 = vld [vmem:[#allocation7 + $0xd8] sm:$0xff]
    %v1495 = vld [vmem:[#allocation7 + $0xe0] sm:$0xff]
    %v1496 = vld [vmem:[#allocation7 + $0xe8] sm:$0xff]
    %v1497 = vld [vmem:[#allocation7 + $0xf0] sm:$0xff]
    %v1498 = vld [vmem:[#allocation7 + $0xf8] sm:$0xff]
    %v1499 = vld [vmem:[#allocation7 + $0x100] sm:$0xff]
    %v1500 = vld [vmem:[#allocation7 + $0x108] sm:$0xff]
    %v1501 = vld [vmem:[#allocation7 + $0x110] sm:$0xff]
    %v1502 = vld [vmem:[#allocation7 + $0x118] sm:$0xff]
    %v1503 = vld [vmem:[#allocation7 + $0x120] sm:$0xff]
    %v1504 = vld [vmem:[#allocation7 + $0x128] sm:$0xff]
    %v1505 = vld [vmem:[#allocation7 + $0x130] sm:$0xff]
    %v1506 = vld [vmem:[#allocation7 + $0x138] sm:$0xff]
    %v1507 = vld [vmem:[#allocation7 + $0x140] sm:$0xff]
    %v1508 = vld [vmem:[#allocation7 + $0x148] sm:$0xff]
    %v1509 = vld [vmem:[#allocation7 + $0x150] sm:$0xff]
    %v1510 = vld [vmem:[#allocation7 + $0x158] sm:$0xff]
    %v1511 = vld [vmem:[#allocation7 + $0x160] sm:$0xff]
    %v1512 = vld [vmem:[#allocation7 + $0x168] sm:$0xff]
    %v1513 = vld [vmem:[#allocation7 + $0x170] sm:$0xff]
    %v1514 = vld [vmem:[#allocation7 + $0x178] sm:$0xff]
    %v1515 = vld [vmem:[#allocation7 + $0x180] sm:$0xff]
    %v1516 = vld [vmem:[#allocation7 + $0x188] sm:$0xff]
    %v1517 = vld [vmem:[#allocation7 + $0x190] sm:$0xff]
    %v1518 = vld [vmem:[#allocation7 + $0x198] sm:$0xff]
    %v1519 = vld [vmem:[#allocation7 + $0x1a0] sm:$0xff]
    %v1520 = vld [vmem:[#allocation7 + $0x1a8] sm:$0xff]
    %v1521 = vld [vmem:[#allocation7 + $0x1b0] sm:$0xff]
    %v1522 = vld [vmem:[#allocation7 + $0x1b8] sm:$0xff]
    %v1523 = vld [vmem:[#allocation7 + $0x1c0] sm:$0xff]
    %v1524 = vld [vmem:[#allocation7 + $0x1c8] sm:$0xff]
    %v1525 = vld [vmem:[#allocation7 + $0x1d0] sm:$0xff]
    %v1526 = vld [vmem:[#allocation7 + $0x1d8] sm:$0xff]
    %v1527 = vld [vmem:[#allocation7 + $0x1e0] sm:$0xff]
    %v1528 = vld [vmem:[#allocation7 + $0x1e8] sm:$0xff]
    %v1529 = vld [vmem:[#allocation7 + $0x1f0] sm:$0xff]
    %v1530 = vld [vmem:[#allocation7 + $0x1f8] sm:$0xff]
    %v1531 = vld [vmem:[#allocation7 + $0x200] sm:$0xff]
    %v1532 = vld [vmem:[#allocation7 + $0x208] sm:$0xff]
    %v1533 = vld [vmem:[#allocation7 + $0x210] sm:$0xff]
    %v1534 = vld [vmem:[#allocation7 + $0x218] sm:$0xff]
    %v1535 = vld [vmem:[#allocation7 + $0x220] sm:$0xff]
    %v1536 = vld [vmem:[#allocation7 + $0x228] sm:$0xff]
    %v1537 = vld [vmem:[#allocation7 + $0x230] sm:$0xff]
    %v1538 = vld [vmem:[#allocation7 + $0x238] sm:$0xff]
    %v1539 = vld [vmem:[#allocation7 + $0x240] sm:$0xff]
    %v1540 = vld [vmem:[#allocation7 + $0x248] sm:$0xff]
    %v1541 = vld [vmem:[#allocation7 + $0x250] sm:$0xff]
    %v1542 = vld [vmem:[#allocation7 + $0x258] sm:$0xff]
    %v1543 = vld [vmem:[#allocation7 + $0x260] sm:$0xff]
    %v1544 = vld [vmem:[#allocation7 + $0x268] sm:$0xff]
    %v1545 = vld [vmem:[#allocation7 + $0x270] sm:$0xff]
    %v1546 = vld [vmem:[#allocation7 + $0x278] sm:$0xff]
    %v1547 = vld [vmem:[#allocation7 + $0x280] sm:$0xff]
    %v1548 = vld [vmem:[#allocation7 + $0x288] sm:$0xff]
    %v1549 = vld [vmem:[#allocation7 + $0x290] sm:$0xff]
    %v1550 = vld [vmem:[#allocation7 + $0x298] sm:$0xff]
    %v1551 = vld [vmem:[#allocation7 + $0x2a0] sm:$0xff]
    %v1552 = vld [vmem:[#allocation7 + $0x2a8] sm:$0xff]
    %v1553 = vld [vmem:[#allocation7 + $0x2b0] sm:$0xff]
    %v1554 = vld [vmem:[#allocation7 + $0x2b8] sm:$0xff]
    %v1555 = vld [vmem:[#allocation7 + $0x2c0] sm:$0xff]
    %v1556 = vld [vmem:[#allocation7 + $0x2c8] sm:$0xff]
    %v1557 = vld [vmem:[#allocation7 + $0x2d0] sm:$0xff]
    %v1558 = vld [vmem:[#allocation7 + $0x2d8] sm:$0xff]
    %v1559 = vld [vmem:[#allocation7 + $0x2e0] sm:$0xff]
    %v1560 = vld [vmem:[#allocation7 + $0x2e8] sm:$0xff]
    %v1561 = vld [vmem:[#allocation7 + $0x2f0] sm:$0xff]
    %v1562 = vld [vmem:[#allocation7 + $0x2f8] sm:$0xff]
    %v1563 = vld [vmem:[#allocation7 + $0x300] sm:$0xff]
    %v1564 = vld [vmem:[#allocation7 + $0x308] sm:$0xff]
    %v1565 = vld [vmem:[#allocation7 + $0x310] sm:$0xff]
    %v1566 = vld [vmem:[#allocation7 + $0x318] sm:$0xff]
    %v1567 = vld [vmem:[#allocation7 + $0x320] sm:$0xff]
    %v1568 = vld [vmem:[#allocation7 + $0x328] sm:$0xff]
    %v1569 = vld [vmem:[#allocation7 + $0x330] sm:$0xff]
    %v1570 = vld [vmem:[#allocation7 + $0x338] sm:$0xff]
    %v1571 = vld [vmem:[#allocation7 + $0x340] sm:$0xff]
    %v1572 = vld [vmem:[#allocation7 + $0x348] sm:$0xff]
    %v1573 = vld [vmem:[#allocation7 + $0x350] sm:$0xff]
    %v1574 = vld [vmem:[#allocation7 + $0x358] sm:$0xff]
    %v1575 = vld [vmem:[#allocation7 + $0x360] sm:$0xff]
    %v1576 = vld [vmem:[#allocation7 + $0x368] sm:$0xff]
    %v1577 = vld [vmem:[#allocation7 + $0x370] sm:$0xff]
    %v1578 = vld [vmem:[#allocation7 + $0x378] sm:$0xff]
    %v1579 = vld [vmem:[#allocation7 + $0x380] sm:$0xff]
    %v1580 = vld [vmem:[#allocation7 + $0x388] sm:$0xff]
    %v1581 = vld [vmem:[#allocation7 + $0x390] sm:$0xff]
    %v1582 = vld [vmem:[#allocation7 + $0x398] sm:$0xff]
    %v1583 = vld [vmem:[#allocation7 + $0x3a0] sm:$0xff]
    %v1584 = vld [vmem:[#allocation7 + $0x3a8] sm:$0xff]
    %v1585 = vld [vmem:[#allocation7 + $0x3b0] sm:$0xff]
    %v1586 = vld [vmem:[#allocation7 + $0x3b8] sm:$0xff]
    %v1587 = vld [vmem:[#allocation7 + $0x3c0] sm:$0xff]
    %v1588 = vld [vmem:[#allocation7 + $0x3c8] sm:$0xff]
    %v1589 = vld [vmem:[#allocation7 + $0x3d0] sm:$0xff]
    %v1590 = vld [vmem:[#allocation7 + $0x3d8] sm:$0xff]
    %v1591 = vld [vmem:[#allocation7 + $0x3e0] sm:$0xff]
    %v1592 = vld [vmem:[#allocation7 + $0x3e8] sm:$0xff]
    %v1593 = vld [vmem:[#allocation7 + $0x3f0] sm:$0xff]
    %v1594 = vld [vmem:[#allocation7 + $0x3f8] sm:$0xff]
    %v1595 = vpack.c.bf16 %v1465, %v1465
    %v1596 = vpack.c.bf16 %v1466, %v1466
    %v1597 = vld [vmem:[%s17] sm:$0xff]
    %v1599 = vperm.slane %v1597, 0
    %v1600 = vperm.slane %v1597, 1
    %v1601 = vperm.slane %v1597, 2
    %v1602 = vperm.slane %v1597, 3
    %v1603 = vperm.slane %v1597, 4
    %v1604 = vperm.slane %v1597, 5
    %v1605 = vperm.slane %v1597, 6
    %v1606 = vperm.slane %v1597, 7
    %v1743 = vunpack.c.l.b16 %v1467
    %v1744 = vunpack.c.h.b16 %v1467
    %v1745 = vunpack.c.l.b16 %v1468
    %v1746 = vunpack.c.h.b16 %v1468
    %v1747 = vunpack.c.l.b16 %v1469
    %v1748 = vunpack.c.h.b16 %v1469
    %v1749 = vunpack.c.l.b16 %v1470
    %v1750 = vunpack.c.h.b16 %v1470
    %v1751 = vunpack.c.l.b16 %v1471
    %v1752 = vunpack.c.h.b16 %v1471
    %v1753 = vunpack.c.l.b16 %v1472
    %v1754 = vunpack.c.h.b16 %v1472
    %v1755 = vunpack.c.l.b16 %v1473
    %v1756 = vunpack.c.h.b16 %v1473
    %v1757 = vunpack.c.l.b16 %v1474
    %v1758 = vunpack.c.h.b16 %v1474
    %v1759 = vunpack.c.l.b16 %v1475
    %v1760 = vunpack.c.h.b16 %v1475
    %v1761 = vunpack.c.l.b16 %v1476
    %v1762 = vunpack.c.h.b16 %v1476
    %v1763 = vunpack.c.l.b16 %v1477
    %v1764 = vunpack.c.h.b16 %v1477
    %v1765 = vunpack.c.l.b16 %v1478
    %v1766 = vunpack.c.h.b16 %v1478
    %v1767 = vunpack.c.l.b16 %v1479
    %v1768 = vunpack.c.h.b16 %v1479
    %v1769 = vunpack.c.l.b16 %v1480
    %v1770 = vunpack.c.h.b16 %v1480
    %v1771 = vunpack.c.l.b16 %v1481
    %v1772 = vunpack.c.h.b16 %v1481
    %v1773 = vunpack.c.l.b16 %v1482
    %v1774 = vunpack.c.h.b16 %v1482
    %v1775 = vunpack.c.l.b16 %v1483
    %v1776 = vunpack.c.h.b16 %v1483
    %v1777 = vunpack.c.l.b16 %v1484
    %v1778 = vunpack.c.h.b16 %v1484
    %v1779 = vunpack.c.l.b16 %v1485
    %v1780 = vunpack.c.h.b16 %v1485
    %v1781 = vunpack.c.l.b16 %v1486
    %v1782 = vunpack.c.h.b16 %v1486
    %v1783 = vunpack.c.l.b16 %v1487
    %v1784 = vunpack.c.h.b16 %v1487
    %v1785 = vunpack.c.l.b16 %v1488
    %v1786 = vunpack.c.h.b16 %v1488
    %v1787 = vunpack.c.l.b16 %v1489
    %v1788 = vunpack.c.h.b16 %v1489
    %v1789 = vunpack.c.l.b16 %v1490
    %v1790 = vunpack.c.h.b16 %v1490
    %v1791 = vunpack.c.l.b16 %v1491
    %v1792 = vunpack.c.h.b16 %v1491
    %v1793 = vunpack.c.l.b16 %v1492
    %v1794 = vunpack.c.h.b16 %v1492
    %v1795 = vunpack.c.l.b16 %v1493
    %v1796 = vunpack.c.h.b16 %v1493
    %v1797 = vunpack.c.l.b16 %v1494
    %v1798 = vunpack.c.h.b16 %v1494
    %v1799 = vunpack.c.l.b16 %v1495
    %v1800 = vunpack.c.h.b16 %v1495
    %v1801 = vunpack.c.l.b16 %v1496
    %v1802 = vunpack.c.h.b16 %v1496
    %v1803 = vunpack.c.l.b16 %v1497
    %v1804 = vunpack.c.h.b16 %v1497
    %v1805 = vunpack.c.l.b16 %v1498
    %v1806 = vunpack.c.h.b16 %v1498
    %v1807 = vunpack.c.l.b16 %v1499
    %v1808 = vunpack.c.h.b16 %v1499
    %v1809 = vunpack.c.l.b16 %v1500
    %v1810 = vunpack.c.h.b16 %v1500
    %v1811 = vunpack.c.l.b16 %v1501
    %v1812 = vunpack.c.h.b16 %v1501
    %v1813 = vunpack.c.l.b16 %v1502
    %v1814 = vunpack.c.h.b16 %v1502
    %v1815 = vunpack.c.l.b16 %v1503
    %v1816 = vunpack.c.h.b16 %v1503
    %v1817 = vunpack.c.l.b16 %v1504
    %v1818 = vunpack.c.h.b16 %v1504
    %v1819 = vunpack.c.l.b16 %v1505
    %v1820 = vunpack.c.h.b16 %v1505
    %v1821 = vunpack.c.l.b16 %v1506
    %v1822 = vunpack.c.h.b16 %v1506
    %v1823 = vunpack.c.l.b16 %v1507
    %v1824 = vunpack.c.h.b16 %v1507
    %v1825 = vunpack.c.l.b16 %v1508
    %v1826 = vunpack.c.h.b16 %v1508
    %v1827 = vunpack.c.l.b16 %v1509
    %v1828 = vunpack.c.h.b16 %v1509
    %v1829 = vunpack.c.l.b16 %v1510
    %v1830 = vunpack.c.h.b16 %v1510
    %v1831 = vunpack.c.l.b16 %v1511
    %v1832 = vunpack.c.h.b16 %v1511
    %v1833 = vunpack.c.l.b16 %v1512
    %v1834 = vunpack.c.h.b16 %v1512
    %v1835 = vunpack.c.l.b16 %v1513
    %v1836 = vunpack.c.h.b16 %v1513
    %v1837 = vunpack.c.l.b16 %v1514
    %v1838 = vunpack.c.h.b16 %v1514
    %v1839 = vunpack.c.l.b16 %v1515
    %v1840 = vunpack.c.h.b16 %v1515
    %v1841 = vunpack.c.l.b16 %v1516
    %v1842 = vunpack.c.h.b16 %v1516
    %v1843 = vunpack.c.l.b16 %v1517
    %v1844 = vunpack.c.h.b16 %v1517
    %v1845 = vunpack.c.l.b16 %v1518
    %v1846 = vunpack.c.h.b16 %v1518
    %v1847 = vunpack.c.l.b16 %v1519
    %v1848 = vunpack.c.h.b16 %v1519
    %v1849 = vunpack.c.l.b16 %v1520
    %v1850 = vunpack.c.h.b16 %v1520
    %v1851 = vunpack.c.l.b16 %v1521
    %v1852 = vunpack.c.h.b16 %v1521
    %v1853 = vunpack.c.l.b16 %v1522
    %v1854 = vunpack.c.h.b16 %v1522
    %v1855 = vunpack.c.l.b16 %v1523
    %v1856 = vunpack.c.h.b16 %v1523
    %v1857 = vunpack.c.l.b16 %v1524
    %v1858 = vunpack.c.h.b16 %v1524
    %v1859 = vunpack.c.l.b16 %v1525
    %v1860 = vunpack.c.h.b16 %v1525
    %v1861 = vunpack.c.l.b16 %v1526
    %v1862 = vunpack.c.h.b16 %v1526
    %v1863 = vunpack.c.l.b16 %v1527
    %v1864 = vunpack.c.h.b16 %v1527
    %v1865 = vunpack.c.l.b16 %v1528
    %v1866 = vunpack.c.h.b16 %v1528
    %v1867 = vunpack.c.l.b16 %v1529
    %v1868 = vunpack.c.h.b16 %v1529
    %v1869 = vunpack.c.l.b16 %v1530
    %v1870 = vunpack.c.h.b16 %v1530
    %v1871 = vunpack.c.l.b16 %v1531
    %v1872 = vunpack.c.h.b16 %v1531
    %v1873 = vunpack.c.l.b16 %v1532
    %v1874 = vunpack.c.h.b16 %v1532
    %v1875 = vunpack.c.l.b16 %v1533
    %v1876 = vunpack.c.h.b16 %v1533
    %v1877 = vunpack.c.l.b16 %v1534
    %v1878 = vunpack.c.h.b16 %v1534
    %v1879 = vunpack.c.l.b16 %v1535
    %v1880 = vunpack.c.h.b16 %v1535
    %v1881 = vunpack.c.l.b16 %v1536
    %v1882 = vunpack.c.h.b16 %v1536
    %v1883 = vunpack.c.l.b16 %v1537
    %v1884 = vunpack.c.h.b16 %v1537
    %v1885 = vunpack.c.l.b16 %v1538
    %v1886 = vunpack.c.h.b16 %v1538
    %v1887 = vunpack.c.l.b16 %v1539
    %v1888 = vunpack.c.h.b16 %v1539
    %v1889 = vunpack.c.l.b16 %v1540
    %v1890 = vunpack.c.h.b16 %v1540
    %v1891 = vunpack.c.l.b16 %v1541
    %v1892 = vunpack.c.h.b16 %v1541
    %v1893 = vunpack.c.l.b16 %v1542
    %v1894 = vunpack.c.h.b16 %v1542
    %v1895 = vunpack.c.l.b16 %v1543
    %v1896 = vunpack.c.h.b16 %v1543
    %v1897 = vunpack.c.l.b16 %v1544
    %v1898 = vunpack.c.h.b16 %v1544
    %v1899 = vunpack.c.l.b16 %v1545
    %v1900 = vunpack.c.h.b16 %v1545
    %v1901 = vunpack.c.l.b16 %v1546
    %v1902 = vunpack.c.h.b16 %v1546
    %v1903 = vunpack.c.l.b16 %v1547
    %v1904 = vunpack.c.h.b16 %v1547
    %v1905 = vunpack.c.l.b16 %v1548
    %v1906 = vunpack.c.h.b16 %v1548
    %v1907 = vunpack.c.l.b16 %v1549
    %v1908 = vunpack.c.h.b16 %v1549
    %v1909 = vunpack.c.l.b16 %v1550
    %v1910 = vunpack.c.h.b16 %v1550
    %v1911 = vunpack.c.l.b16 %v1551
    %v1912 = vunpack.c.h.b16 %v1551
    %v1913 = vunpack.c.l.b16 %v1552
    %v1914 = vunpack.c.h.b16 %v1552
    %v1915 = vunpack.c.l.b16 %v1553
    %v1916 = vunpack.c.h.b16 %v1553
    %v1917 = vunpack.c.l.b16 %v1554
    %v1918 = vunpack.c.h.b16 %v1554
    %v1919 = vunpack.c.l.b16 %v1555
    %v1920 = vunpack.c.h.b16 %v1555
    %v1921 = vunpack.c.l.b16 %v1556
    %v1922 = vunpack.c.h.b16 %v1556
    %v1923 = vunpack.c.l.b16 %v1557
    %v1924 = vunpack.c.h.b16 %v1557
    %v1925 = vunpack.c.l.b16 %v1558
    %v1926 = vunpack.c.h.b16 %v1558
    %v1927 = vunpack.c.l.b16 %v1559
    %v1928 = vunpack.c.h.b16 %v1559
    %v1929 = vunpack.c.l.b16 %v1560
    %v1930 = vunpack.c.h.b16 %v1560
    %v1931 = vunpack.c.l.b16 %v1561
    %v1932 = vunpack.c.h.b16 %v1561
    %v1933 = vunpack.c.l.b16 %v1562
    %v1934 = vunpack.c.h.b16 %v1562
    %v1935 = vunpack.c.l.b16 %v1563
    %v1936 = vunpack.c.h.b16 %v1563
    %v1937 = vunpack.c.l.b16 %v1564
    %v1938 = vunpack.c.h.b16 %v1564
    %v1939 = vunpack.c.l.b16 %v1565
    %v1940 = vunpack.c.h.b16 %v1565
    %v1941 = vunpack.c.l.b16 %v1566
    %v1942 = vunpack.c.h.b16 %v1566
    %v1943 = vunpack.c.l.b16 %v1567
    %v1944 = vunpack.c.h.b16 %v1567
    %v1945 = vunpack.c.l.b16 %v1568
    %v1946 = vunpack.c.h.b16 %v1568
    %v1947 = vunpack.c.l.b16 %v1569
    %v1948 = vunpack.c.h.b16 %v1569
    %v1949 = vunpack.c.l.b16 %v1570
    %v1950 = vunpack.c.h.b16 %v1570
    %v1951 = vunpack.c.l.b16 %v1571
    %v1952 = vunpack.c.h.b16 %v1571
    %v1953 = vunpack.c.l.b16 %v1572
    %v1954 = vunpack.c.h.b16 %v1572
    %v1955 = vunpack.c.l.b16 %v1573
    %v1956 = vunpack.c.h.b16 %v1573
    %v1957 = vunpack.c.l.b16 %v1574
    %v1958 = vunpack.c.h.b16 %v1574
    %v1959 = vunpack.c.l.b16 %v1575
    %v1960 = vunpack.c.h.b16 %v1575
    %v1961 = vunpack.c.l.b16 %v1576
    %v1962 = vunpack.c.h.b16 %v1576
    %v1963 = vunpack.c.l.b16 %v1577
    %v1964 = vunpack.c.h.b16 %v1577
    %v1965 = vunpack.c.l.b16 %v1578
    %v1966 = vunpack.c.h.b16 %v1578
    %v1967 = vunpack.c.l.b16 %v1579
    %v1968 = vunpack.c.h.b16 %v1579
    %v1969 = vunpack.c.l.b16 %v1580
    %v1970 = vunpack.c.h.b16 %v1580
    %v1971 = vunpack.c.l.b16 %v1581
    %v1972 = vunpack.c.h.b16 %v1581
    %v1973 = vunpack.c.l.b16 %v1582
    %v1974 = vunpack.c.h.b16 %v1582
    %v1975 = vunpack.c.l.b16 %v1583
    %v1976 = vunpack.c.h.b16 %v1583
    %v1977 = vunpack.c.l.b16 %v1584
    %v1978 = vunpack.c.h.b16 %v1584
    %v1979 = vunpack.c.l.b16 %v1585
    %v1980 = vunpack.c.h.b16 %v1585
    %v1981 = vunpack.c.l.b16 %v1586
    %v1982 = vunpack.c.h.b16 %v1586
    %v1983 = vunpack.c.l.b16 %v1587
    %v1984 = vunpack.c.h.b16 %v1587
    %v1985 = vunpack.c.l.b16 %v1588
    %v1986 = vunpack.c.h.b16 %v1588
    %v1987 = vunpack.c.l.b16 %v1589
    %v1988 = vunpack.c.h.b16 %v1589
    %v1989 = vunpack.c.l.b16 %v1590
    %v1990 = vunpack.c.h.b16 %v1590
    %v1991 = vunpack.c.l.b16 %v1591
    %v1992 = vunpack.c.h.b16 %v1591
    %v1993 = vunpack.c.l.b16 %v1592
    %v1994 = vunpack.c.h.b16 %v1592
    %v1995 = vunpack.c.l.b16 %v1593
    %v1996 = vunpack.c.h.b16 %v1593
    %v1997 = vunpack.c.l.b16 %v1594
    %v1998 = vunpack.c.h.b16 %v1594
    %v1999 = vpack.c.b16 %v1751, %v1743
    %v2000 = vpack.c.b16 %v1752, %v1744
    %v2001 = vpack.c.b16 %v1753, %v1745
    %v2002 = vpack.c.b16 %v1754, %v1746
    %v2003 = vpack.c.b16 %v1755, %v1747
    %v2004 = vpack.c.b16 %v1756, %v1748
    %v2005 = vpack.c.b16 %v1757, %v1749
    %v2006 = vpack.c.b16 %v1758, %v1750
    %v2007 = vpack.c.b16 %v1767, %v1759
    %v2008 = vpack.c.b16 %v1768, %v1760
    %v2009 = vpack.c.b16 %v1769, %v1761
    %v2010 = vpack.c.b16 %v1770, %v1762
    %v2011 = vpack.c.b16 %v1771, %v1763
    %v2012 = vpack.c.b16 %v1772, %v1764
    %v2013 = vpack.c.b16 %v1773, %v1765
    %v2014 = vpack.c.b16 %v1774, %v1766
    %v2015 = vpack.c.b16 %v1783, %v1775
    %v2016 = vpack.c.b16 %v1784, %v1776
    %v2017 = vpack.c.b16 %v1785, %v1777
    %v2018 = vpack.c.b16 %v1786, %v1778
    %v2019 = vpack.c.b16 %v1787, %v1779
    %v2020 = vpack.c.b16 %v1788, %v1780
    %v2021 = vpack.c.b16 %v1789, %v1781
    %v2022 = vpack.c.b16 %v1790, %v1782
    %v2023 = vpack.c.b16 %v1799, %v1791
    %v2024 = vpack.c.b16 %v1800, %v1792
    %v2025 = vpack.c.b16 %v1801, %v1793
    %v2026 = vpack.c.b16 %v1802, %v1794
    %v2027 = vpack.c.b16 %v1803, %v1795
    %v2028 = vpack.c.b16 %v1804, %v1796
    %v2029 = vpack.c.b16 %v1805, %v1797
    %v2030 = vpack.c.b16 %v1806, %v1798
    %v2031 = vpack.c.b16 %v1815, %v1807
    %v2032 = vpack.c.b16 %v1816, %v1808
    %v2033 = vpack.c.b16 %v1817, %v1809
    %v2034 = vpack.c.b16 %v1818, %v1810
    %v2035 = vpack.c.b16 %v1819, %v1811
    %v2036 = vpack.c.b16 %v1820, %v1812
    %v2037 = vpack.c.b16 %v1821, %v1813
    %v2038 = vpack.c.b16 %v1822, %v1814
    %v2039 = vpack.c.b16 %v1831, %v1823
    %v2040 = vpack.c.b16 %v1832, %v1824
    %v2041 = vpack.c.b16 %v1833, %v1825
    %v2042 = vpack.c.b16 %v1834, %v1826
    %v2043 = vpack.c.b16 %v1835, %v1827
    %v2044 = vpack.c.b16 %v1836, %v1828
    %v2045 = vpack.c.b16 %v1837, %v1829
    %v2046 = vpack.c.b16 %v1838, %v1830
    %v2047 = vpack.c.b16 %v1847, %v1839
    %v2048 = vpack.c.b16 %v1848, %v1840
    %v2049 = vpack.c.b16 %v1849, %v1841
    %v2050 = vpack.c.b16 %v1850, %v1842
    %v2051 = vpack.c.b16 %v1851, %v1843
    %v2052 = vpack.c.b16 %v1852, %v1844
    %v2053 = vpack.c.b16 %v1853, %v1845
    %v2054 = vpack.c.b16 %v1854, %v1846
    %v2055 = vpack.c.b16 %v1863, %v1855
    %v2056 = vpack.c.b16 %v1864, %v1856
    %v2057 = vpack.c.b16 %v1865, %v1857
    %v2058 = vpack.c.b16 %v1866, %v1858
    %v2059 = vpack.c.b16 %v1867, %v1859
    %v2060 = vpack.c.b16 %v1868, %v1860
    %v2061 = vpack.c.b16 %v1869, %v1861
    %v2062 = vpack.c.b16 %v1870, %v1862
    %v2063 = vpack.c.b16 %v1879, %v1871
    %v2064 = vpack.c.b16 %v1880, %v1872
    %v2065 = vpack.c.b16 %v1881, %v1873
    %v2066 = vpack.c.b16 %v1882, %v1874
    %v2067 = vpack.c.b16 %v1883, %v1875
    %v2068 = vpack.c.b16 %v1884, %v1876
    %v2069 = vpack.c.b16 %v1885, %v1877
    %v2070 = vpack.c.b16 %v1886, %v1878
    %v2071 = vpack.c.b16 %v1895, %v1887
    %v2072 = vpack.c.b16 %v1896, %v1888
    %v2073 = vpack.c.b16 %v1897, %v1889
    %v2074 = vpack.c.b16 %v1898, %v1890
    %v2075 = vpack.c.b16 %v1899, %v1891
    %v2076 = vpack.c.b16 %v1900, %v1892
    %v2077 = vpack.c.b16 %v1901, %v1893
    %v2078 = vpack.c.b16 %v1902, %v1894
    %v2079 = vpack.c.b16 %v1911, %v1903
    %v2080 = vpack.c.b16 %v1912, %v1904
    %v2081 = vpack.c.b16 %v1913, %v1905
    %v2082 = vpack.c.b16 %v1914, %v1906
    %v2083 = vpack.c.b16 %v1915, %v1907
    %v2084 = vpack.c.b16 %v1916, %v1908
    %v2085 = vpack.c.b16 %v1917, %v1909
    %v2086 = vpack.c.b16 %v1918, %v1910
    %v2087 = vpack.c.b16 %v1927, %v1919
    %v2088 = vpack.c.b16 %v1928, %v1920
    %v2089 = vpack.c.b16 %v1929, %v1921
    %v2090 = vpack.c.b16 %v1930, %v1922
    %v2091 = vpack.c.b16 %v1931, %v1923
    %v2092 = vpack.c.b16 %v1932, %v1924
    %v2093 = vpack.c.b16 %v1933, %v1925
    %v2094 = vpack.c.b16 %v1934, %v1926
    %v2095 = vpack.c.b16 %v1943, %v1935
    %v2096 = vpack.c.b16 %v1944, %v1936
    %v2097 = vpack.c.b16 %v1945, %v1937
    %v2098 = vpack.c.b16 %v1946, %v1938
    %v2099 = vpack.c.b16 %v1947, %v1939
    %v2100 = vpack.c.b16 %v1948, %v1940
    %v2101 = vpack.c.b16 %v1949, %v1941
    %v2102 = vpack.c.b16 %v1950, %v1942
    %v2103 = vpack.c.b16 %v1959, %v1951
    %v2104 = vpack.c.b16 %v1960, %v1952
    %v2105 = vpack.c.b16 %v1961, %v1953
    %v2106 = vpack.c.b16 %v1962, %v1954
    %v2107 = vpack.c.b16 %v1963, %v1955
    %v2108 = vpack.c.b16 %v1964, %v1956
    %v2109 = vpack.c.b16 %v1965, %v1957
    %v2110 = vpack.c.b16 %v1966, %v1958
    %v2111 = vpack.c.b16 %v1975, %v1967
    %v2112 = vpack.c.b16 %v1976, %v1968
    %v2113 = vpack.c.b16 %v1977, %v1969
    %v2114 = vpack.c.b16 %v1978, %v1970
    %v2115 = vpack.c.b16 %v1979, %v1971
    %v2116 = vpack.c.b16 %v1980, %v1972
    %v2117 = vpack.c.b16 %v1981, %v1973
    %v2118 = vpack.c.b16 %v1982, %v1974
    %v2119 = vpack.c.b16 %v1991, %v1983
    %v2120 = vpack.c.b16 %v1992, %v1984
    %v2121 = vpack.c.b16 %v1993, %v1985
    %v2122 = vpack.c.b16 %v1994, %v1986
    %v2123 = vpack.c.b16 %v1995, %v1987
    %v2124 = vpack.c.b16 %v1996, %v1988
    %v2125 = vpack.c.b16 %v1997, %v1989
    %v2126 = vpack.c.b16 %v1998, %v1990
    %2255 = vmatpush.bf16.msra.mxu0 %v2055
    %2256 = vmatpush.bf16.msra.mxu0 %v2047
    %2257 = vmatpush.bf16.msra.mxu0 %v2039
    %2258 = vmatpush.bf16.msra.mxu0 %v2031
    %2259 = vmatpush.bf16.msra.mxu0 %v2023
    %2260 = vmatpush.bf16.msra.mxu0 %v2015
    %2261 = vmatpush.bf16.msra.mxu0 %v2007
    %2262 = vmatpush.bf16.msra.mxu0 %v1999
    %2263 = vmatmul.bf16.gmra.mxu0 %v1595
    %v2264 = vpop.f32.mrf.mxu0
    %v2265 = vadd.f32 %v1599, %v2264
    %v2266 = vpop.f32.mrf.mxu0
    %2267 = vdwg.mxu0
    %2268 = vmatpush.bf16.msra.mxu0 %v2119
    %2269 = vmatpush.bf16.msra.mxu0 %v2111
    %2270 = vmatpush.bf16.msra.mxu0 %v2103
    %2271 = vmatpush.bf16.msra.mxu0 %v2095
    %2272 = vmatpush.bf16.msra.mxu0 %v2087
    %2273 = vmatpush.bf16.msra.mxu0 %v2079
    %2274 = vmatpush.bf16.msra.mxu0 %v2071
    %2275 = vmatpush.bf16.msra.mxu0 %v2063
    %2276 = vmatmul.bf16.gmra.mxu0 %v1596
    %v2277 = vpop.f32.mrf.mxu0
    %v2278 = vadd.f32 %v2265, %v2277
    %v2279 = vpop.f32.mrf.mxu0
    %2280 = vdwg.mxu0
    %2281 = vmatpush.bf16.msra.mxu0 %v2056
    %2282 = vmatpush.bf16.msra.mxu0 %v2048
    %2283 = vmatpush.bf16.msra.mxu0 %v2040
    %2284 = vmatpush.bf16.msra.mxu0 %v2032
    %2285 = vmatpush.bf16.msra.mxu0 %v2024
    %2286 = vmatpush.bf16.msra.mxu0 %v2016
    %2287 = vmatpush.bf16.msra.mxu0 %v2008
    %2288 = vmatpush.bf16.msra.mxu0 %v2000
    %2289 = vmatmul.bf16.gmra.mxu0 %v1595
    %v2290 = vpop.f32.mrf.mxu0
    %v2291 = vadd.f32 %v1600, %v2290
    %v2292 = vpop.f32.mrf.mxu0
    %2293 = vdwg.mxu0
    %2294 = vmatpush.bf16.msra.mxu0 %v2120
    %2295 = vmatpush.bf16.msra.mxu0 %v2112
    %2296 = vmatpush.bf16.msra.mxu0 %v2104
    %2297 = vmatpush.bf16.msra.mxu0 %v2096
    %2298 = vmatpush.bf16.msra.mxu0 %v2088
    %2299 = vmatpush.bf16.msra.mxu0 %v2080
    %2300 = vmatpush.bf16.msra.mxu0 %v2072
    %2301 = vmatpush.bf16.msra.mxu0 %v2064
    %2302 = vmatmul.bf16.gmra.mxu0 %v1596
    %v2303 = vpop.f32.mrf.mxu0
    %v2304 = vadd.f32 %v2291, %v2303
    %v2305 = vpop.f32.mrf.mxu0
    %2306 = vdwg.mxu0
    %2307 = vmatpush.bf16.msra.mxu0 %v2057
    %2308 = vmatpush.bf16.msra.mxu0 %v2049
    %2309 = vmatpush.bf16.msra.mxu0 %v2041
    %2310 = vmatpush.bf16.msra.mxu0 %v2033
    %2311 = vmatpush.bf16.msra.mxu0 %v2025
    %2312 = vmatpush.bf16.msra.mxu0 %v2017
    %2313 = vmatpush.bf16.msra.mxu0 %v2009
    %2314 = vmatpush.bf16.msra.mxu0 %v2001
    %2315 = vmatmul.bf16.gmra.mxu0 %v1595
    %v2316 = vpop.f32.mrf.mxu0
    %v2317 = vadd.f32 %v1601, %v2316
    %v2318 = vpop.f32.mrf.mxu0
    %2319 = vdwg.mxu0
    %2320 = vmatpush.bf16.msra.mxu0 %v2121
    %2321 = vmatpush.bf16.msra.mxu0 %v2113
    %2322 = vmatpush.bf16.msra.mxu0 %v2105
    %2323 = vmatpush.bf16.msra.mxu0 %v2097
    %2324 = vmatpush.bf16.msra.mxu0 %v2089
    %2325 = vmatpush.bf16.msra.mxu0 %v2081
    %2326 = vmatpush.bf16.msra.mxu0 %v2073
    %2327 = vmatpush.bf16.msra.mxu0 %v2065
    %2328 = vmatmul.bf16.gmra.mxu0 %v1596
    %v2329 = vpop.f32.mrf.mxu0
    %v2330 = vadd.f32 %v2317, %v2329
    %v2331 = vpop.f32.mrf.mxu0
    %2332 = vdwg.mxu0
    %2333 = vmatpush.bf16.msra.mxu0 %v2058
    %2334 = vmatpush.bf16.msra.mxu0 %v2050
    %2335 = vmatpush.bf16.msra.mxu0 %v2042
    %2336 = vmatpush.bf16.msra.mxu0 %v2034
    %2337 = vmatpush.bf16.msra.mxu0 %v2026
    %2338 = vmatpush.bf16.msra.mxu0 %v2018
    %2339 = vmatpush.bf16.msra.mxu0 %v2010
    %2340 = vmatpush.bf16.msra.mxu0 %v2002
    %2341 = vmatmul.bf16.gmra.mxu0 %v1595
    %v2342 = vpop.f32.mrf.mxu0
    %v2343 = vadd.f32 %v1602, %v2342
    %v2344 = vpop.f32.mrf.mxu0
    %2345 = vdwg.mxu0
    %2346 = vmatpush.bf16.msra.mxu0 %v2122
    %2347 = vmatpush.bf16.msra.mxu0 %v2114
    %2348 = vmatpush.bf16.msra.mxu0 %v2106
    %2349 = vmatpush.bf16.msra.mxu0 %v2098
    %2350 = vmatpush.bf16.msra.mxu0 %v2090
    %2351 = vmatpush.bf16.msra.mxu0 %v2082
    %2352 = vmatpush.bf16.msra.mxu0 %v2074
    %2353 = vmatpush.bf16.msra.mxu0 %v2066
    %2354 = vmatmul.bf16.gmra.mxu0 %v1596
    %v2355 = vpop.f32.mrf.mxu0
    %v2356 = vadd.f32 %v2343, %v2355
    %v2357 = vpop.f32.mrf.mxu0
    %2358 = vdwg.mxu0
    %2359 = vmatpush.bf16.msra.mxu0 %v2059
    %2360 = vmatpush.bf16.msra.mxu0 %v2051
    %2361 = vmatpush.bf16.msra.mxu0 %v2043
    %2362 = vmatpush.bf16.msra.mxu0 %v2035
    %2363 = vmatpush.bf16.msra.mxu0 %v2027
    %2364 = vmatpush.bf16.msra.mxu0 %v2019
    %2365 = vmatpush.bf16.msra.mxu0 %v2011
    %2366 = vmatpush.bf16.msra.mxu0 %v2003
    %2367 = vmatmul.bf16.gmra.mxu0 %v1595
    %v2368 = vpop.f32.mrf.mxu0
    %v2369 = vadd.f32 %v1603, %v2368
    %v2370 = vpop.f32.mrf.mxu0
    %2371 = vdwg.mxu0
    %2372 = vmatpush.bf16.msra.mxu0 %v2123
    %2373 = vmatpush.bf16.msra.mxu0 %v2115
    %2374 = vmatpush.bf16.msra.mxu0 %v2107
    %2375 = vmatpush.bf16.msra.mxu0 %v2099
    %2376 = vmatpush.bf16.msra.mxu0 %v2091
    %2377 = vmatpush.bf16.msra.mxu0 %v2083
    %2378 = vmatpush.bf16.msra.mxu0 %v2075
    %2379 = vmatpush.bf16.msra.mxu0 %v2067
    %2380 = vmatmul.bf16.gmra.mxu0 %v1596
    %v2381 = vpop.f32.mrf.mxu0
    %v2382 = vadd.f32 %v2369, %v2381
    %v2383 = vpop.f32.mrf.mxu0
    %2384 = vdwg.mxu0
    %2385 = vmatpush.bf16.msra.mxu0 %v2060
    %2386 = vmatpush.bf16.msra.mxu0 %v2052
    %2387 = vmatpush.bf16.msra.mxu0 %v2044
    %2388 = vmatpush.bf16.msra.mxu0 %v2036
    %2389 = vmatpush.bf16.msra.mxu0 %v2028
    %2390 = vmatpush.bf16.msra.mxu0 %v2020
    %2391 = vmatpush.bf16.msra.mxu0 %v2012
    %2392 = vmatpush.bf16.msra.mxu0 %v2004
    %2393 = vmatmul.bf16.gmra.mxu0 %v1595
    %v2394 = vpop.f32.mrf.mxu0
    %v2395 = vadd.f32 %v1604, %v2394
    %v2396 = vpop.f32.mrf.mxu0
    %2397 = vdwg.mxu0
    %2398 = vmatpush.bf16.msra.mxu0 %v2124
    %2399 = vmatpush.bf16.msra.mxu0 %v2116
    %2400 = vmatpush.bf16.msra.mxu0 %v2108
    %2401 = vmatpush.bf16.msra.mxu0 %v2100
    %2402 = vmatpush.bf16.msra.mxu0 %v2092
    %2403 = vmatpush.bf16.msra.mxu0 %v2084
    %2404 = vmatpush.bf16.msra.mxu0 %v2076
    %2405 = vmatpush.bf16.msra.mxu0 %v2068
    %2406 = vmatmul.bf16.gmra.mxu0 %v1596
    %v2407 = vpop.f32.mrf.mxu0
    %v2408 = vadd.f32 %v2395, %v2407
    %v2409 = vpop.f32.mrf.mxu0
    %2410 = vdwg.mxu0
    %2411 = vmatpush.bf16.msra.mxu0 %v2061
    %2412 = vmatpush.bf16.msra.mxu0 %v2053
    %2413 = vmatpush.bf16.msra.mxu0 %v2045
    %2414 = vmatpush.bf16.msra.mxu0 %v2037
    %2415 = vmatpush.bf16.msra.mxu0 %v2029
    %2416 = vmatpush.bf16.msra.mxu0 %v2021
    %2417 = vmatpush.bf16.msra.mxu0 %v2013
    %2418 = vmatpush.bf16.msra.mxu0 %v2005
    %2419 = vmatmul.bf16.gmra.mxu0 %v1595
    %v2420 = vpop.f32.mrf.mxu0
    %v2421 = vadd.f32 %v1605, %v2420
    %v2422 = vpop.f32.mrf.mxu0
    %2423 = vdwg.mxu0
    %2424 = vmatpush.bf16.msra.mxu0 %v2125
    %2425 = vmatpush.bf16.msra.mxu0 %v2117
    %2426 = vmatpush.bf16.msra.mxu0 %v2109
    %2427 = vmatpush.bf16.msra.mxu0 %v2101
    %2428 = vmatpush.bf16.msra.mxu0 %v2093
    %2429 = vmatpush.bf16.msra.mxu0 %v2085
    %2430 = vmatpush.bf16.msra.mxu0 %v2077
    %2431 = vmatpush.bf16.msra.mxu0 %v2069
    %2432 = vmatmul.bf16.gmra.mxu0 %v1596
    %v2433 = vpop.f32.mrf.mxu0
    %v2434 = vadd.f32 %v2421, %v2433
    %v2435 = vpop.f32.mrf.mxu0
    %2436 = vdwg.mxu0
    %2437 = vmatpush.bf16.msra.mxu0 %v2062
    %2438 = vmatpush.bf16.msra.mxu0 %v2054
    %2439 = vmatpush.bf16.msra.mxu0 %v2046
    %2440 = vmatpush.bf16.msra.mxu0 %v2038
    %2441 = vmatpush.bf16.msra.mxu0 %v2030
    %2442 = vmatpush.bf16.msra.mxu0 %v2022
    %2443 = vmatpush.bf16.msra.mxu0 %v2014
    %2444 = vmatpush.bf16.msra.mxu0 %v2006
    %2445 = vmatmul.bf16.gmra.mxu0 %v1595
    %v2446 = vpop.f32.mrf.mxu0
    %v2447 = vadd.f32 %v1606, %v2446
    %v2448 = vpop.f32.mrf.mxu0
    %2449 = vdwg.mxu0
    %2450 = vmatpush.bf16.msra.mxu0 %v2126
    %2451 = vmatpush.bf16.msra.mxu0 %v2118
    %2452 = vmatpush.bf16.msra.mxu0 %v2110
    %2453 = vmatpush.bf16.msra.mxu0 %v2102
    %2454 = vmatpush.bf16.msra.mxu0 %v2094
    %2455 = vmatpush.bf16.msra.mxu0 %v2086
    %2456 = vmatpush.bf16.msra.mxu0 %v2078
    %2457 = vmatpush.bf16.msra.mxu0 %v2070
    %2458 = vmatmul.bf16.gmra.mxu0 %v1596
    %v2459 = vpop.f32.mrf.mxu0
    %v2460 = vadd.f32 %v2447, %v2459
    %v2461 = vpop.f32.mrf.mxu0
    %2462 = vdwg.mxu0
    %v2463 = vxor.u32 %v2278, 2147483648
    %v2464 = vxor.u32 %v2304, 2147483648
    %v2465 = vxor.u32 %v2330, 2147483648
    %v2466 = vxor.u32 %v2356, 2147483648
    %v2467 = vxor.u32 %v2382, 2147483648
    %v2468 = vxor.u32 %v2408, 2147483648
    %v2469 = vxor.u32 %v2434, 2147483648
    %v2470 = vxor.u32 %v2460, 2147483648
    %v2471 = vmul.f32 %v2463, 1.442695
    %v2472 = vpow.pop %v2471
    %v2473 = vmul.f32 %v2464, 1.442695
    %v2474 = vpow.pop %v2473
    %v2475 = vmul.f32 %v2465, 1.442695
    %v2476 = vpow.pop %v2475
    %v2477 = vmul.f32 %v2466, 1.442695
    %v2478 = vpow.pop %v2477
    %v2479 = vmul.f32 %v2467, 1.442695
    %v2480 = vpow.pop %v2479
    %v2481 = vmul.f32 %v2468, 1.442695
    %v2482 = vpow.pop %v2481
    %v2483 = vmul.f32 %v2469, 1.442695
    %v2484 = vpow.pop %v2483
    %v2485 = vmul.f32 %v2470, 1.442695
    %v2486 = vpow.pop %v2485
    %v2487 = vadd.f32 %v2472, 1.0
    %v2488 = vadd.f32 %v2474, 1.0
    %v2489 = vadd.f32 %v2476, 1.0
    %v2490 = vadd.f32 %v2478, 1.0
    %v2491 = vadd.f32 %v2480, 1.0
    %v2492 = vadd.f32 %v2482, 1.0
    %v2493 = vadd.f32 %v2484, 1.0
    %v2494 = vadd.f32 %v2486, 1.0
    %v2495 = vrcp.pop %v2487
    %v2496 = vmul.f32 %v2487, %v2495
    %v2497 = vsub.f32 1.0, %v2496
    %v2498 = vmul.f32 %v2495, %v2497
    %v2499 = vadd.f32 %v2495, %v2498
    %vm2500 = vweird.f32 %v2487
    %vm2501 = vweird.f32 %v2495
    %vm2502 = vmor %vm2500, %vm2501
    %v2503 = vsel %vm2502, %v2495, %v2499
    %v2504 = vand.u32 2147483647, %v2487
    %vm2505 = vcmp.eq.f32.partialorder %v2504, 8.507059e+37
    %v2506 = vand.u32 %v2487, 2147483648
    %v2507 = vor.u32 1.1754944e-38, %v2506
    %v2508 = vsel %vm2505, %v2507, %v2503
    %v2509 = vmul.f32 1.0, %v2508
    %v2510 = vrcp.pop %v2488
    %v2511 = vmul.f32 %v2488, %v2510
    %v2512 = vsub.f32 1.0, %v2511
    %v2513 = vmul.f32 %v2510, %v2512
    %v2514 = vadd.f32 %v2510, %v2513
    %vm2515 = vweird.f32 %v2488
    %vm2516 = vweird.f32 %v2510
    %vm2517 = vmor %vm2515, %vm2516
    %v2518 = vsel %vm2517, %v2510, %v2514
    %v2519 = vand.u32 2147483647, %v2488
    %vm2520 = vcmp.eq.f32.partialorder %v2519, 8.507059e+37
    %v2521 = vand.u32 %v2488, 2147483648
    %v2522 = vor.u32 1.1754944e-38, %v2521
    %v2523 = vsel %vm2520, %v2522, %v2518
    %v2524 = vmul.f32 1.0, %v2523
    %v2525 = vrcp.pop %v2489
    %v2526 = vmul.f32 %v2489, %v2525
    %v2527 = vsub.f32 1.0, %v2526
    %v2528 = vmul.f32 %v2525, %v2527
    %v2529 = vadd.f32 %v2525, %v2528
    %vm2530 = vweird.f32 %v2489
    %vm2531 = vweird.f32 %v2525
    %vm2532 = vmor %vm2530, %vm2531
    %v2533 = vsel %vm2532, %v2525, %v2529
    %v2534 = vand.u32 2147483647, %v2489
    %vm2535 = vcmp.eq.f32.partialorder %v2534, 8.507059e+37
    %v2536 = vand.u32 %v2489, 2147483648
    %v2537 = vor.u32 1.1754944e-38, %v2536
    %v2538 = vsel %vm2535, %v2537, %v2533
    %v2539 = vmul.f32 1.0, %v2538
    %v2540 = vrcp.pop %v2490
    %v2541 = vmul.f32 %v2490, %v2540
    %v2542 = vsub.f32 1.0, %v2541
    %v2543 = vmul.f32 %v2540, %v2542
    %v2544 = vadd.f32 %v2540, %v2543
    %vm2545 = vweird.f32 %v2490
    %vm2546 = vweird.f32 %v2540
    %vm2547 = vmor %vm2545, %vm2546
    %v2548 = vsel %vm2547, %v2540, %v2544
    %v2549 = vand.u32 2147483647, %v2490
    %vm2550 = vcmp.eq.f32.partialorder %v2549, 8.507059e+37
    %v2551 = vand.u32 %v2490, 2147483648
    %v2552 = vor.u32 1.1754944e-38, %v2551
    %v2553 = vsel %vm2550, %v2552, %v2548
    %v2554 = vmul.f32 1.0, %v2553
    %v2555 = vrcp.pop %v2491
    %v2556 = vmul.f32 %v2491, %v2555
    %v2557 = vsub.f32 1.0, %v2556
    %v2558 = vmul.f32 %v2555, %v2557
    %v2559 = vadd.f32 %v2555, %v2558
    %vm2560 = vweird.f32 %v2491
    %vm2561 = vweird.f32 %v2555
    %vm2562 = vmor %vm2560, %vm2561
    %v2563 = vsel %vm2562, %v2555, %v2559
    %v2564 = vand.u32 2147483647, %v2491
    %vm2565 = vcmp.eq.f32.partialorder %v2564, 8.507059e+37
    %v2566 = vand.u32 %v2491, 2147483648
    %v2567 = vor.u32 1.1754944e-38, %v2566
    %v2568 = vsel %vm2565, %v2567, %v2563
    %v2569 = vmul.f32 1.0, %v2568
    %v2570 = vrcp.pop %v2492
    %v2571 = vmul.f32 %v2492, %v2570
    %v2572 = vsub.f32 1.0, %v2571
    %v2573 = vmul.f32 %v2570, %v2572
    %v2574 = vadd.f32 %v2570, %v2573
    %vm2575 = vweird.f32 %v2492
    %vm2576 = vweird.f32 %v2570
    %vm2577 = vmor %vm2575, %vm2576
    %v2578 = vsel %vm2577, %v2570, %v2574
    %v2579 = vand.u32 2147483647, %v2492
    %vm2580 = vcmp.eq.f32.partialorder %v2579, 8.507059e+37
    %v2581 = vand.u32 %v2492, 2147483648
    %v2582 = vor.u32 1.1754944e-38, %v2581
    %v2583 = vsel %vm2580, %v2582, %v2578
    %v2584 = vmul.f32 1.0, %v2583
    %v2585 = vrcp.pop %v2493
    %v2586 = vmul.f32 %v2493, %v2585
    %v2587 = vsub.f32 1.0, %v2586
    %v2588 = vmul.f32 %v2585, %v2587
    %v2589 = vadd.f32 %v2585, %v2588
    %vm2590 = vweird.f32 %v2493
    %vm2591 = vweird.f32 %v2585
    %vm2592 = vmor %vm2590, %vm2591
    %v2593 = vsel %vm2592, %v2585, %v2589
    %v2594 = vand.u32 2147483647, %v2493
    %vm2595 = vcmp.eq.f32.partialorder %v2594, 8.507059e+37
    %v2596 = vand.u32 %v2493, 2147483648
    %v2597 = vor.u32 1.1754944e-38, %v2596
    %v2598 = vsel %vm2595, %v2597, %v2593
    %v2599 = vmul.f32 1.0, %v2598
    %v2600 = vrcp.pop %v2494
    %v2601 = vmul.f32 %v2494, %v2600
    %v2602 = vsub.f32 1.0, %v2601
    %v2603 = vmul.f32 %v2600, %v2602
    %v2604 = vadd.f32 %v2600, %v2603
    %vm2605 = vweird.f32 %v2494
    %vm2606 = vweird.f32 %v2600
    %vm2607 = vmor %vm2605, %vm2606
    %v2608 = vsel %vm2607, %v2600, %v2604
    %v2609 = vand.u32 2147483647, %v2494
    %vm2610 = vcmp.eq.f32.partialorder %v2609, 8.507059e+37
    %v2611 = vand.u32 %v2494, 2147483648
    %v2612 = vor.u32 1.1754944e-38, %v2611
    %v2613 = vsel %vm2610, %v2612, %v2608
    %v2614 = vmul.f32 1.0, %v2613
    %v2623 = vrot.slane %v2524, 6
    %v2624 = vrot.slane %v2539, 4
    %v2625 = vrot.slane %v2554, 2
    %v2626 = vrot.slane %v2584, 6
    %v2627 = vrot.slane %v2599, 4
    %v2628 = vrot.slane %v2614, 2
    %vm2629 = vcmask 1041408
    %v2630 = vsel %vm2629, %v2509, %v2623
    %vm2631 = vcmask 1045508
    %v2632 = vsel %vm2631, %v2624, %v2625
    %vm2633 = vcmask 1043456
    %v2634 = vsel %vm2633, %v2630, %v2632
    %v2635 = vsel %vm2629, %v2569, %v2626
    %v2636 = vsel %vm2631, %v2627, %v2628
    %v2637 = vsel %vm2633, %v2635, %v2636
    %2640 = vst [vmem:[%s18] sm:$0xff] %v2634
    %2641 = vst [vmem:[%s18 + $0x8] sm:$0xff] %v2637
    // Predicated region
    $region90: #{vae_forward.1} parent=1 // pred_check
      _
    $region91: #{vae_forward.1} parent=1 // pred_check_branch
      %2643 = sbr.rel (0) target = $region93
    $region92: #{vae_forward.1} parent=1 // pred_region
      _
    $region93: #{vae_forward.1} parent=1 // pred_fallthru
      _
    // Predicated region
    $region94: #{vae_forward.1} parent=1 // pred_check
      _
    $region95: #{vae_forward.1} parent=1 // pred_check_branch
      %2645 = sbr.rel (0) target = $region97
    $region96: #{vae_forward.1} parent=1 // pred_region
      _
    $region97: #{vae_forward.1} parent=1 // pred_fallthru
      _
    // Predicated region
    $region98: #{vae_forward.1} parent=1 // pred_check
      _
    $region99: #{vae_forward.1} parent=1 // pred_check_branch
      %2647 = sbr.rel (0) target = $region101
    $region100: #{vae_forward.1} parent=1 // pred_region
      _
    $region101: #{vae_forward.1} parent=1 // pred_fallthru
      _
    // Predicated region
    $region102: #{vae_forward.1} parent=1 // pred_check
      _
    $region103: #{vae_forward.1} parent=1 // pred_check_branch
      %2649 = sbr.rel (0) target = $region105
    $region104: #{vae_forward.1} parent=1 // pred_region
      _
    $region105: #{vae_forward.1} parent=1 // pred_fallthru
      _
    %2650 = vsyncpa [#allocation3], 1
    %2651 = vsyncpa [#allocation5], 1
    %2652 = vsyncpa [#allocation8], 1

</llo_original>
